<compile_context>
chip_gen: v7x
topology: tpu7x:2x2x1
jax: 0.10.0
libtpu: 0.0.40
codegen_flags: <defaults>
</compile_context>

<pallas_src>
import functools
import math

import jax
import jax.numpy as jnp
from jax.experimental import pallas as pl
from jax.experimental.pallas import tpu as pltpu


# ----------------------------------------------------------------------------
# Fused kernel: QKV projection + per-head attention + FC + residual + LayerNorm
# One grid step per batch element; all weights resident in VMEM.
# ----------------------------------------------------------------------------
def _fused_mha_kernel(xq_ref, xk_ref, xv_ref,
                      wq_ref, wk_ref, wv_ref,
                      bq_ref, bk_ref, bv_ref,
                      wfc_ref, bfc_ref, g_ref, beta_ref,
                      o_ref, attn_ref,
                      *, n_head, d_k, d_v, temperature, eps):
    f32 = jnp.float32
    bf16 = jnp.bfloat16
    inv_temp = 1.0 / temperature

    xq = xq_ref[0]                       # [Lq, d_model]
    xk = xk_ref[0]                       # [Lk, d_model]
    xv = xv_ref[0]                       # [Lv, d_model]

    # --- Q / K / V projections (bf16 MXU inputs, f32 accumulation) ----------
    q = jnp.dot(xq.astype(bf16), wq_ref[...].astype(bf16),
                preferred_element_type=f32) + bq_ref[...].astype(f32)
    k = jnp.dot(xk.astype(bf16), wk_ref[...].astype(bf16),
                preferred_element_type=f32) + bk_ref[...].astype(f32)
    v = jnp.dot(xv.astype(bf16), wv_ref[...].astype(bf16),
                preferred_element_type=f32) + bv_ref[...].astype(f32)

    # Accumulate residual + fc bias up front; per-head fc contributions added
    # below (this fuses the head-concat into the output projection).
    y = xq.astype(f32) + bfc_ref[...].astype(f32)          # [Lq, d_model]
    wfc = wfc_ref[...].astype(bf16)                         # [H*d_v, d_model]

    qk_dims = (((1,), (1,)), ((), ()))   # contract last dims: q @ k^T

    for h in range(n_head):              # static unroll; no extra grid steps
        qh = q[:, h * d_k:(h + 1) * d_k]                    # [Lq, d_k]
        kh = k[:, h * d_k:(h + 1) * d_k]                    # [Lk, d_k]
        vh = v[:, h * d_v:(h + 1) * d_v]                    # [Lk, d_v]

        s = jax.lax.dot_general(qh.astype(bf16), kh.astype(bf16),
                                dimension_numbers=qk_dims,
                                preferred_element_type=f32) * inv_temp
        s = s - jnp.max(s, axis=-1, keepdims=True)          # stable softmax
        e = jnp.exp(s)
        p = e * pl.reciprocal(jnp.sum(e, axis=-1, keepdims=True), approx=True)

        attn_ref[0, h] = p.astype(attn_ref.dtype)           # [Lq, Lk]

        ctx = jnp.dot(p.astype(bf16), vh.astype(bf16),
                      preferred_element_type=f32)           # [Lq, d_v]
        y = y + jnp.dot(ctx.astype(bf16), wfc[h * d_v:(h + 1) * d_v, :],
                        preferred_element_type=f32)         # [Lq, d_model]

    # --- LayerNorm (f32 statistics, eps = 1e-12) ----------------------------
    mu = jnp.mean(y, axis=-1, keepdims=True)
    var = jnp.mean(jnp.square(y - mu), axis=-1, keepdims=True)
    yn = (y - mu) * jax.lax.rsqrt(var + eps)
    o_ref[0] = (yn * g_ref[...].astype(f32)
                + beta_ref[...].astype(f32)).astype(o_ref.dtype)


def tensor_attention_forward(q, k, v, params, *, n_head, d_k, d_v, eps=1e-12):
    B, len_q, d_model = q.shape
    len_k = k.shape[1]
    len_v = v.shape[1]
    assert len_k == len_v

    d_qk = n_head * d_k
    d_vh = n_head * d_v

    kernel = functools.partial(
        _fused_mha_kernel, n_head=n_head, d_k=d_k, d_v=d_v,
        temperature=float(d_k) ** 0.5, eps=eps)

    def resident(shape):  # weights / biases: same block for every grid step
        return pl.BlockSpec(shape, lambda b: (0, 0))

    out, attn = pl.pallas_call(
        kernel,
        out_shape=(
            jax.ShapeDtypeStruct((B, len_q, d_model), q.dtype),
            jax.ShapeDtypeStruct((B, n_head, len_q, len_k), q.dtype),
        ),
        grid=(B,),
        in_specs=[
            pl.BlockSpec((1, len_q, d_model), lambda b: (b, 0, 0)),
            pl.BlockSpec((1, len_k, d_model), lambda b: (b, 0, 0)),
            pl.BlockSpec((1, len_v, d_model), lambda b: (b, 0, 0)),
            resident((d_model, d_qk)),     # Wq
            resident((d_model, d_qk)),     # Wk
            resident((d_model, d_vh)),     # Wv
            resident((1, d_qk)),           # bq
            resident((1, d_qk)),           # bk
            resident((1, d_vh)),           # bv
            resident((d_vh, d_model)),     # Wfc
            resident((1, d_model)),        # bfc
            resident((1, d_model)),        # gamma
            resident((1, d_model)),        # beta
        ],
        out_specs=(
            pl.BlockSpec((1, len_q, d_model), lambda b: (b, 0, 0)),
            pl.BlockSpec((1, n_head, len_q, len_k), lambda b: (b, 0, 0, 0)),
        ),
        compiler_params=pltpu.CompilerParams(
            dimension_semantics=("parallel",)),
    )(q, k, v,
      params["Wq"], params["Wk"], params["Wv"],
      params["bq"].reshape(1, d_qk),
      params["bk"].reshape(1, d_qk),
      params["bv"].reshape(1, d_vh),
      params["Wfc"],
      params["bfc"].reshape(1, d_model),
      params["gamma"].reshape(1, d_model),
      params["beta"].reshape(1, d_model))

    kl_loss = jnp.zeros((), jnp.float32)   # use_kl=False in the reference call
    return out, attn, kl_loss


# ----------------------------------------------------------------------------
# Parameter setup (plain JAX glue, not the hot path): deterministic TT cores
# contracted to a dense (d_in, d_out) weight — matches TensorizedLinear_module
# semantics of a low-rank TensorTrain factorized linear layer.
# ----------------------------------------------------------------------------
def tt_dense_weight(key, in_factors, out_factors, max_rank):
    factors = list(in_factors) + list(out_factors)
    n = len(factors)
    ranks = [1] + [max_rank] * (n - 1) + [1]
    t = None
    for i, f in enumerate(factors):
        key, sub = jax.random.split(key)
        core = jax.random.normal(sub, (ranks[i], f, ranks[i + 1]), dtype=jnp.float32)
        core = core * (1.0 / math.sqrt(ranks[i] * f))
        t = core if t is None else jnp.tensordot(t, core, axes=[[-1], [0]])
    t = t.reshape(factors)
    d_in = math.prod(in_factors)
    d_out = math.prod(out_factors)
    return t.reshape(d_in, d_out)


# ----------------------------------------------------------------------------
if __name__ == "__main__":
    # Small shapes consistent with the module: d_model = 32, n_head = 2,
    # d_q = d_k = d_v = 16  =>  d_k * n_head = 32 = d_model.
    B, L, d_model = 2, 8, 32
    n_head, d_k, d_v = 2, 16, 16
    in_factors, out_factors = (4, 8), (4, 8)   # prod = 32 each
    max_rank = 4

    key = jax.random.PRNGKey(0)
    ks = jax.random.split(key, 12)

    params = {
        "Wq": tt_dense_weight(ks[0], in_factors, out_factors, max_rank),
        "Wk": tt_dense_weight(ks[1], in_factors, out_factors, max_rank),
        "Wv": tt_dense_weight(ks[2], in_factors, out_factors, max_rank),
        "Wfc": tt_dense_weight(ks[3], in_factors, out_factors, max_rank),
        "bq": 0.01 * jax.random.normal(ks[4], (n_head * d_k,), jnp.float32),
        "bk": 0.01 * jax.random.normal(ks[5], (n_head * d_k,), jnp.float32),
        "bv": 0.01 * jax.random.normal(ks[6], (n_head * d_v,), jnp.float32),
        "bfc": 0.01 * jax.random.normal(ks[7], (d_model,), jnp.float32),
        "gamma": jnp.ones((d_model,), jnp.float32),
        "beta": jnp.zeros((d_model,), jnp.float32),
    }

    q_in = jax.random.normal(ks[8], (B, L, d_model), jnp.float32)
    k_in = jax.random.normal(ks[9], (B, L, d_model), jnp.float32)
    v_in = jax.random.normal(ks[10], (B, L, d_model), jnp.float32)

    out, attn, kl = tensor_attention_forward(
        q_in, k_in, v_in, params, n_head=n_head, d_k=d_k, d_v=d_v)
    jax.block_until_ready((out, attn, kl))

    assert out.shape == (B, L, d_model)
    assert attn.shape == (B, n_head, L, L)
    assert bool(jnp.all(jnp.isfinite(out)))
    print("KERNEL_OK")
</pallas_src>

<mosaic_0001>
module attributes {stable_mosaic.version = 11 : i64} {
  func.func @_fused_mha_kernel(%arg0: i32, %arg1: memref<1x8x32xf32, #tpu.memory_space<vmem>>, %arg2: memref<1x8x32xf32, #tpu.memory_space<vmem>>, %arg3: memref<1x8x32xf32, #tpu.memory_space<vmem>>, %arg4: memref<32x32xf32, #tpu.memory_space<vmem>>, %arg5: memref<32x32xf32, #tpu.memory_space<vmem>>, %arg6: memref<32x32xf32, #tpu.memory_space<vmem>>, %arg7: memref<1x32xf32, #tpu.memory_space<vmem>>, %arg8: memref<1x32xf32, #tpu.memory_space<vmem>>, %arg9: memref<1x32xf32, #tpu.memory_space<vmem>>, %arg10: memref<32x32xf32, #tpu.memory_space<vmem>>, %arg11: memref<1x32xf32, #tpu.memory_space<vmem>>, %arg12: memref<1x32xf32, #tpu.memory_space<vmem>>, %arg13: memref<1x32xf32, #tpu.memory_space<vmem>>, %arg14: memref<1x8x32xf32, #tpu.memory_space<vmem>>, %arg15: memref<1x2x8x8xf32, #tpu.memory_space<vmem>>) attributes {dimension_semantics = [#tpu.dimension_semantics<parallel>], iteration_bounds = array<i64: 2>, scalar_prefetch = 0 : i64, scratch_operands = 0 : i64, tpu.core_type = #tpu.core_type<tc>, window_params = [{transform_indices = @transform_0, window_bounds = array<i64: 1, 8, 32>}, {transform_indices = @transform_1, window_bounds = array<i64: 1, 8, 32>}, {transform_indices = @transform_2, window_bounds = array<i64: 1, 8, 32>}, {pipeline_mode = #tpu.pipeline_mode<synchronous>, transform_indices = @transform_3, window_bounds = array<i64: 32, 32>}, {pipeline_mode = #tpu.pipeline_mode<synchronous>, transform_indices = @transform_4, window_bounds = array<i64: 32, 32>}, {pipeline_mode = #tpu.pipeline_mode<synchronous>, transform_indices = @transform_5, window_bounds = array<i64: 32, 32>}, {pipeline_mode = #tpu.pipeline_mode<synchronous>, transform_indices = @transform_6, window_bounds = array<i64: 1, 32>}, {pipeline_mode = #tpu.pipeline_mode<synchronous>, transform_indices = @transform_7, window_bounds = array<i64: 1, 32>}, {pipeline_mode = #tpu.pipeline_mode<synchronous>, transform_indices = @transform_8, window_bounds = array<i64: 1, 32>}, {pipeline_mode = #tpu.pipeline_mode<synchronous>, transform_indices = @transform_9, window_bounds = array<i64: 32, 32>}, {pipeline_mode = #tpu.pipeline_mode<synchronous>, transform_indices = @transform_10, window_bounds = array<i64: 1, 32>}, {pipeline_mode = #tpu.pipeline_mode<synchronous>, transform_indices = @transform_11, window_bounds = array<i64: 1, 32>}, {pipeline_mode = #tpu.pipeline_mode<synchronous>, transform_indices = @transform_12, window_bounds = array<i64: 1, 32>}, {transform_indices = @transform_13, window_bounds = array<i64: 1, 8, 32>}, {transform_indices = @transform_14, window_bounds = array<i64: 1, 2, 8, 8>}]} {
    %c0 = arith.constant 0 : index
    %c0_0 = arith.constant 0 : index
    %c0_1 = arith.constant 0 : index
    %0 = vector.load %arg1[%c0, %c0_0, %c0_1] : memref<1x8x32xf32, #tpu.memory_space<vmem>>, vector<1x8x32xf32>
    %1 = vector.shape_cast %0 : vector<1x8x32xf32> to vector<8x32xf32>
    %c0_2 = arith.constant 0 : index
    %c0_3 = arith.constant 0 : index
    %c0_4 = arith.constant 0 : index
    %2 = vector.load %arg2[%c0_2, %c0_3, %c0_4] : memref<1x8x32xf32, #tpu.memory_space<vmem>>, vector<1x8x32xf32>
    %3 = vector.shape_cast %2 : vector<1x8x32xf32> to vector<8x32xf32>
    %c0_5 = arith.constant 0 : index
    %c0_6 = arith.constant 0 : index
    %c0_7 = arith.constant 0 : index
    %4 = vector.load %arg3[%c0_5, %c0_6, %c0_7] : memref<1x8x32xf32, #tpu.memory_space<vmem>>, vector<1x8x32xf32>
    %5 = vector.shape_cast %4 : vector<1x8x32xf32> to vector<8x32xf32>
    %6 = arith.truncf %1 : vector<8x32xf32> to vector<8x32xbf16>
    %c0_8 = arith.constant 0 : index
    %c0_9 = arith.constant 0 : index
    %7 = vector.load %arg4[%c0_8, %c0_9] : memref<32x32xf32, #tpu.memory_space<vmem>>, vector<32x32xf32>
    %8 = arith.truncf %7 : vector<32x32xf32> to vector<32x32xbf16>
    %cst = arith.constant dense<0.000000e+00> : vector<8x32xf32>
    %9 = tpu.matmul %6, %8, %cst {dimension_numbers = #tpu.dot_dimension_numbers<[1], [0], [0], [1], [0, 0, 1, 1], [], []>} : vector<8x32xbf16>, vector<32x32xbf16>, vector<8x32xf32> -> vector<8x32xf32>
    %c0_10 = arith.constant 0 : index
    %c0_11 = arith.constant 0 : index
    %10 = vector.load %arg7[%c0_10, %c0_11] : memref<1x32xf32, #tpu.memory_space<vmem>>, vector<1x32xf32>
    %11 = vector.broadcast %10 : vector<1x32xf32> to vector<8x32xf32>
    %12 = arith.addf %9, %11 : vector<8x32xf32>
    %13 = arith.truncf %3 : vector<8x32xf32> to vector<8x32xbf16>
    %c0_12 = arith.constant 0 : index
    %c0_13 = arith.constant 0 : index
    %14 = vector.load %arg5[%c0_12, %c0_13] : memref<32x32xf32, #tpu.memory_space<vmem>>, vector<32x32xf32>
    %15 = arith.truncf %14 : vector<32x32xf32> to vector<32x32xbf16>
    %cst_14 = arith.constant dense<0.000000e+00> : vector<8x32xf32>
    %16 = tpu.matmul %13, %15, %cst_14 {dimension_numbers = #tpu.dot_dimension_numbers<[1], [0], [0], [1], [0, 0, 1, 1], [], []>} : vector<8x32xbf16>, vector<32x32xbf16>, vector<8x32xf32> -> vector<8x32xf32>
    %c0_15 = arith.constant 0 : index
    %c0_16 = arith.constant 0 : index
    %17 = vector.load %arg8[%c0_15, %c0_16] : memref<1x32xf32, #tpu.memory_space<vmem>>, vector<1x32xf32>
    %18 = vector.broadcast %17 : vector<1x32xf32> to vector<8x32xf32>
    %19 = arith.addf %16, %18 : vector<8x32xf32>
    %20 = arith.truncf %5 : vector<8x32xf32> to vector<8x32xbf16>
    %c0_17 = arith.constant 0 : index
    %c0_18 = arith.constant 0 : index
    %21 = vector.load %arg6[%c0_17, %c0_18] : memref<32x32xf32, #tpu.memory_space<vmem>>, vector<32x32xf32>
    %22 = arith.truncf %21 : vector<32x32xf32> to vector<32x32xbf16>
    %cst_19 = arith.constant dense<0.000000e+00> : vector<8x32xf32>
    %23 = tpu.matmul %20, %22, %cst_19 {dimension_numbers = #tpu.dot_dimension_numbers<[1], [0], [0], [1], [0, 0, 1, 1], [], []>} : vector<8x32xbf16>, vector<32x32xbf16>, vector<8x32xf32> -> vector<8x32xf32>
    %c0_20 = arith.constant 0 : index
    %c0_21 = arith.constant 0 : index
    %24 = vector.load %arg9[%c0_20, %c0_21] : memref<1x32xf32, #tpu.memory_space<vmem>>, vector<1x32xf32>
    %25 = vector.broadcast %24 : vector<1x32xf32> to vector<8x32xf32>
    %26 = arith.addf %23, %25 : vector<8x32xf32>
    %c0_22 = arith.constant 0 : index
    %c0_23 = arith.constant 0 : index
    %27 = vector.load %arg11[%c0_22, %c0_23] : memref<1x32xf32, #tpu.memory_space<vmem>>, vector<1x32xf32>
    %28 = vector.broadcast %27 : vector<1x32xf32> to vector<8x32xf32>
    %29 = arith.addf %1, %28 : vector<8x32xf32>
    %c0_24 = arith.constant 0 : index
    %c0_25 = arith.constant 0 : index
    %30 = vector.load %arg10[%c0_24, %c0_25] : memref<32x32xf32, #tpu.memory_space<vmem>>, vector<32x32xf32>
    %31 = arith.truncf %30 : vector<32x32xf32> to vector<32x32xbf16>
    %32 = vector.extract_strided_slice %12 {offsets = [0, 0], sizes = [8, 16], strides = [1, 1]} : vector<8x32xf32> to vector<8x16xf32>
    %33 = vector.extract_strided_slice %19 {offsets = [0, 0], sizes = [8, 16], strides = [1, 1]} : vector<8x32xf32> to vector<8x16xf32>
    %34 = vector.extract_strided_slice %26 {offsets = [0, 0], sizes = [8, 16], strides = [1, 1]} : vector<8x32xf32> to vector<8x16xf32>
    %35 = arith.truncf %32 : vector<8x16xf32> to vector<8x16xbf16>
    %36 = arith.truncf %33 : vector<8x16xf32> to vector<8x16xbf16>
    %cst_26 = arith.constant dense<0.000000e+00> : vector<8x8xf32>
    %37 = tpu.matmul %35, %36, %cst_26 {dimension_numbers = #tpu.dot_dimension_numbers<[1], [1], [0], [0], [0, 0, 1, 0], [], []>} : vector<8x16xbf16>, vector<8x16xbf16>, vector<8x8xf32> -> vector<8x8xf32>
    %cst_27 = arith.constant 2.500000e-01 : f32
    %38 = vector.broadcast %cst_27 : f32 to vector<8x8xf32>
    %39 = arith.mulf %37, %38 : vector<8x8xf32>
    %cst_28 = arith.constant dense<0xFF800000> : vector<8xf32>
    %40 = vector.multi_reduction <maximumf>, %39, %cst_28 [1] : vector<8x8xf32> to vector<8xf32>
    %41 = vector.shape_cast %40 : vector<8xf32> to vector<8x1xf32>
    %42 = vector.broadcast %41 : vector<8x1xf32> to vector<8x8xf32>
    %43 = arith.subf %39, %42 : vector<8x8xf32>
    %44 = math.exp %43 : vector<8x8xf32>
    %cst_29 = arith.constant dense<0.000000e+00> : vector<8xf32>
    %45 = vector.multi_reduction <add>, %44, %cst_29 [1] : vector<8x8xf32> to vector<8xf32>
    %46 = vector.shape_cast %45 : vector<8xf32> to vector<8x1xf32>
    %47 = tpu.reciprocal %46 {approx = true} : vector<8x1xf32> -> vector<8x1xf32>
    %48 = vector.broadcast %47 : vector<8x1xf32> to vector<8x8xf32>
    %49 = arith.mulf %44, %48 : vector<8x8xf32>
    %c0_30 = arith.constant 0 : index
    %c0_31 = arith.constant 0 : index
    %c0_32 = arith.constant 0 : index
    %c0_33 = arith.constant 0 : index
    %50 = vector.load %arg15[%c0_30, %c0_31, %c0_32, %c0_33] : memref<1x2x8x8xf32, #tpu.memory_space<vmem>>, vector<1x1x8x8xf32>
    %51 = vector.shape_cast %50 : vector<1x1x8x8xf32> to vector<8x8xf32>
    %52 = vector.shape_cast %49 : vector<8x8xf32> to vector<1x1x8x8xf32>
    tpu.vector_store %arg15[%c0_30, %c0_31, %c0_32, %c0_33], %52 {strides = array<i32>} : memref<1x2x8x8xf32, #tpu.memory_space<vmem>>, vector<1x1x8x8xf32>,
    %53 = arith.truncf %49 : vector<8x8xf32> to vector<8x8xbf16>
    %54 = arith.truncf %34 : vector<8x16xf32> to vector<8x16xbf16>
    %cst_34 = arith.constant dense<0.000000e+00> : vector<8x16xf32>
    %55 = tpu.matmul %53, %54, %cst_34 {dimension_numbers = #tpu.dot_dimension_numbers<[1], [0], [0], [1], [0, 0, 1, 1], [], []>} : vector<8x8xbf16>, vector<8x16xbf16>, vector<8x16xf32> -> vector<8x16xf32>
    %56 = arith.truncf %55 : vector<8x16xf32> to vector<8x16xbf16>
    %57 = vector.extract_strided_slice %31 {offsets = [0, 0], sizes = [16, 32], strides = [1, 1]} : vector<32x32xbf16> to vector<16x32xbf16>
    %cst_35 = arith.constant dense<0.000000e+00> : vector<8x32xf32>
    %58 = tpu.matmul %56, %57, %cst_35 {dimension_numbers = #tpu.dot_dimension_numbers<[1], [0], [0], [1], [0, 0, 1, 1], [], []>} : vector<8x16xbf16>, vector<16x32xbf16>, vector<8x32xf32> -> vector<8x32xf32>
    %59 = arith.addf %29, %58 : vector<8x32xf32>
    %60 = vector.extract_strided_slice %12 {offsets = [0, 16], sizes = [8, 16], strides = [1, 1]} : vector<8x32xf32> to vector<8x16xf32>
    %61 = vector.extract_strided_slice %19 {offsets = [0, 16], sizes = [8, 16], strides = [1, 1]} : vector<8x32xf32> to vector<8x16xf32>
    %62 = vector.extract_strided_slice %26 {offsets = [0, 16], sizes = [8, 16], strides = [1, 1]} : vector<8x32xf32> to vector<8x16xf32>
    %63 = arith.truncf %60 : vector<8x16xf32> to vector<8x16xbf16>
    %64 = arith.truncf %61 : vector<8x16xf32> to vector<8x16xbf16>
    %cst_36 = arith.constant dense<0.000000e+00> : vector<8x8xf32>
    %65 = tpu.matmul %63, %64, %cst_36 {dimension_numbers = #tpu.dot_dimension_numbers<[1], [1], [0], [0], [0, 0, 1, 0], [], []>} : vector<8x16xbf16>, vector<8x16xbf16>, vector<8x8xf32> -> vector<8x8xf32>
    %cst_37 = arith.constant 2.500000e-01 : f32
    %66 = vector.broadcast %cst_37 : f32 to vector<8x8xf32>
    %67 = arith.mulf %65, %66 : vector<8x8xf32>
    %cst_38 = arith.constant dense<0xFF800000> : vector<8xf32>
    %68 = vector.multi_reduction <maximumf>, %67, %cst_38 [1] : vector<8x8xf32> to vector<8xf32>
    %69 = vector.shape_cast %68 : vector<8xf32> to vector<8x1xf32>
    %70 = vector.broadcast %69 : vector<8x1xf32> to vector<8x8xf32>
    %71 = arith.subf %67, %70 : vector<8x8xf32>
    %72 = math.exp %71 : vector<8x8xf32>
    %cst_39 = arith.constant dense<0.000000e+00> : vector<8xf32>
    %73 = vector.multi_reduction <add>, %72, %cst_39 [1] : vector<8x8xf32> to vector<8xf32>
    %74 = vector.shape_cast %73 : vector<8xf32> to vector<8x1xf32>
    %75 = tpu.reciprocal %74 {approx = true} : vector<8x1xf32> -> vector<8x1xf32>
    %76 = vector.broadcast %75 : vector<8x1xf32> to vector<8x8xf32>
    %77 = arith.mulf %72, %76 : vector<8x8xf32>
    %c0_40 = arith.constant 0 : index
    %c1 = arith.constant 1 : index
    %c0_41 = arith.constant 0 : index
    %c0_42 = arith.constant 0 : index
    %78 = vector.load %arg15[%c0_40, %c1, %c0_41, %c0_42] : memref<1x2x8x8xf32, #tpu.memory_space<vmem>>, vector<1x1x8x8xf32>
    %79 = vector.shape_cast %78 : vector<1x1x8x8xf32> to vector<8x8xf32>
    %80 = vector.shape_cast %77 : vector<8x8xf32> to vector<1x1x8x8xf32>
    tpu.vector_store %arg15[%c0_40, %c1, %c0_41, %c0_42], %80 {strides = array<i32>} : memref<1x2x8x8xf32, #tpu.memory_space<vmem>>, vector<1x1x8x8xf32>,
    %81 = arith.truncf %77 : vector<8x8xf32> to vector<8x8xbf16>
    %82 = arith.truncf %62 : vector<8x16xf32> to vector<8x16xbf16>
    %cst_43 = arith.constant dense<0.000000e+00> : vector<8x16xf32>
    %83 = tpu.matmul %81, %82, %cst_43 {dimension_numbers = #tpu.dot_dimension_numbers<[1], [0], [0], [1], [0, 0, 1, 1], [], []>} : vector<8x8xbf16>, vector<8x16xbf16>, vector<8x16xf32> -> vector<8x16xf32>
    %84 = arith.truncf %83 : vector<8x16xf32> to vector<8x16xbf16>
    %85 = vector.extract_strided_slice %31 {offsets = [16, 0], sizes = [16, 32], strides = [1, 1]} : vector<32x32xbf16> to vector<16x32xbf16>
    %cst_44 = arith.constant dense<0.000000e+00> : vector<8x32xf32>
    %86 = tpu.matmul %84, %85, %cst_44 {dimension_numbers = #tpu.dot_dimension_numbers<[1], [0], [0], [1], [0, 0, 1, 1], [], []>} : vector<8x16xbf16>, vector<16x32xbf16>, vector<8x32xf32> -> vector<8x32xf32>
    %87 = arith.addf %59, %86 : vector<8x32xf32>
    %cst_45 = arith.constant dense<0.000000e+00> : vector<8xf32>
    %88 = vector.multi_reduction <add>, %87, %cst_45 [1] : vector<8x32xf32> to vector<8xf32>
    %89 = vector.shape_cast %88 : vector<8xf32> to vector<8x1xf32>
    %cst_46 = arith.constant 3.200000e+01 : f32
    %90 = vector.broadcast %cst_46 : f32 to vector<8x1xf32>
    %91 = arith.divf %89, %90 : vector<8x1xf32>
    %92 = vector.broadcast %91 : vector<8x1xf32> to vector<8x32xf32>
    %93 = arith.subf %87, %92 : vector<8x32xf32>
    %94 = arith.mulf %93, %93 : vector<8x32xf32>
    %cst_47 = arith.constant dense<0.000000e+00> : vector<8xf32>
    %95 = vector.multi_reduction <add>, %94, %cst_47 [1] : vector<8x32xf32> to vector<8xf32>
    %96 = vector.shape_cast %95 : vector<8xf32> to vector<8x1xf32>
    %cst_48 = arith.constant 3.200000e+01 : f32
    %97 = vector.broadcast %cst_48 : f32 to vector<8x1xf32>
    %98 = arith.divf %96, %97 : vector<8x1xf32>
    %99 = vector.broadcast %91 : vector<8x1xf32> to vector<8x32xf32>
    %100 = arith.subf %87, %99 : vector<8x32xf32>
    %cst_49 = arith.constant 9.99999996E-13 : f32
    %101 = vector.broadcast %cst_49 : f32 to vector<8x1xf32>
    %102 = arith.addf %98, %101 : vector<8x1xf32>
    %103 = math.rsqrt %102 : vector<8x1xf32>
    %104 = vector.broadcast %103 : vector<8x1xf32> to vector<8x32xf32>
    %105 = arith.mulf %100, %104 : vector<8x32xf32>
    %c0_50 = arith.constant 0 : index
    %c0_51 = arith.constant 0 : index
    %106 = vector.load %arg12[%c0_50, %c0_51] : memref<1x32xf32, #tpu.memory_space<vmem>>, vector<1x32xf32>
    %107 = vector.broadcast %106 : vector<1x32xf32> to vector<8x32xf32>
    %108 = arith.mulf %105, %107 : vector<8x32xf32>
    %c0_52 = arith.constant 0 : index
    %c0_53 = arith.constant 0 : index
    %109 = vector.load %arg13[%c0_52, %c0_53] : memref<1x32xf32, #tpu.memory_space<vmem>>, vector<1x32xf32>
    %110 = vector.broadcast %109 : vector<1x32xf32> to vector<8x32xf32>
    %111 = arith.addf %108, %110 : vector<8x32xf32>
    %c0_54 = arith.constant 0 : index
    %c0_55 = arith.constant 0 : index
    %c0_56 = arith.constant 0 : index
    %112 = vector.load %arg14[%c0_54, %c0_55, %c0_56] : memref<1x8x32xf32, #tpu.memory_space<vmem>>, vector<1x8x32xf32>
    %113 = vector.shape_cast %112 : vector<1x8x32xf32> to vector<8x32xf32>
    %114 = vector.shape_cast %111 : vector<8x32xf32> to vector<1x8x32xf32>
    tpu.vector_store %arg14[%c0_54, %c0_55, %c0_56], %114 {strides = array<i32>} : memref<1x8x32xf32, #tpu.memory_space<vmem>>, vector<1x8x32xf32>,
    return
  }
  func.func @transform_0(%arg0: i32) -> (i32, i32, i32) {
    %c0_i32 = arith.constant 0 : i32
    %c0_i32_0 = arith.constant 0 : i32
    %c0_i32_1 = arith.constant 0 : i32
    return %arg0, %c0_i32, %c0_i32_0 : i32, i32, i32
  }
  func.func @transform_1(%arg0: i32) -> (i32, i32, i32) {
    %c0_i32 = arith.constant 0 : i32
    %c0_i32_0 = arith.constant 0 : i32
    %c0_i32_1 = arith.constant 0 : i32
    return %arg0, %c0_i32, %c0_i32_0 : i32, i32, i32
  }
  func.func @transform_2(%arg0: i32) -> (i32, i32, i32) {
    %c0_i32 = arith.constant 0 : i32
    %c0_i32_0 = arith.constant 0 : i32
    %c0_i32_1 = arith.constant 0 : i32
    return %arg0, %c0_i32, %c0_i32_0 : i32, i32, i32
  }
  func.func @transform_3(%arg0: i32) -> (i32, i32) {
    %c0_i32 = arith.constant 0 : i32
    %c0_i32_0 = arith.constant 0 : i32
    %c0_i32_1 = arith.constant 0 : i32
    return %c0_i32, %c0_i32_0 : i32, i32
  }
  func.func @transform_4(%arg0: i32) -> (i32, i32) {
    %c0_i32 = arith.constant 0 : i32
    %c0_i32_0 = arith.constant 0 : i32
    %c0_i32_1 = arith.constant 0 : i32
    return %c0_i32, %c0_i32_0 : i32, i32
  }
  func.func @transform_5(%arg0: i32) -> (i32, i32) {
    %c0_i32 = arith.constant 0 : i32
    %c0_i32_0 = arith.constant 0 : i32
    %c0_i32_1 = arith.constant 0 : i32
    return %c0_i32, %c0_i32_0 : i32, i32
  }
  func.func @transform_6(%arg0: i32) -> (i32, i32) {
    %c0_i32 = arith.constant 0 : i32
    %c0_i32_0 = arith.constant 0 : i32
    %c0_i32_1 = arith.constant 0 : i32
    return %c0_i32, %c0_i32_0 : i32, i32
  }
  func.func @transform_7(%arg0: i32) -> (i32, i32) {
    %c0_i32 = arith.constant 0 : i32
    %c0_i32_0 = arith.constant 0 : i32
    %c0_i32_1 = arith.constant 0 : i32
    return %c0_i32, %c0_i32_0 : i32, i32
  }
  func.func @transform_8(%arg0: i32) -> (i32, i32) {
    %c0_i32 = arith.constant 0 : i32
    %c0_i32_0 = arith.constant 0 : i32
    %c0_i32_1 = arith.constant 0 : i32
    return %c0_i32, %c0_i32_0 : i32, i32
  }
  func.func @transform_9(%arg0: i32) -> (i32, i32) {
    %c0_i32 = arith.constant 0 : i32
    %c0_i32_0 = arith.constant 0 : i32
    %c0_i32_1 = arith.constant 0 : i32
    return %c0_i32, %c0_i32_0 : i32, i32
  }
  func.func @transform_10(%arg0: i32) -> (i32, i32) {
    %c0_i32 = arith.constant 0 : i32
    %c0_i32_0 = arith.constant 0 : i32
    %c0_i32_1 = arith.constant 0 : i32
    return %c0_i32, %c0_i32_0 : i32, i32
  }
  func.func @transform_11(%arg0: i32) -> (i32, i32) {
    %c0_i32 = arith.constant 0 : i32
    %c0_i32_0 = arith.constant 0 : i32
    %c0_i32_1 = arith.constant 0 : i32
    return %c0_i32, %c0_i32_0 : i32, i32
  }
  func.func @transform_12(%arg0: i32) -> (i32, i32) {
    %c0_i32 = arith.constant 0 : i32
    %c0_i32_0 = arith.constant 0 : i32
    %c0_i32_1 = arith.constant 0 : i32
    return %c0_i32, %c0_i32_0 : i32, i32
  }
  func.func @transform_13(%arg0: i32) -> (i32, i32, i32) {
    %c0_i32 = arith.constant 0 : i32
    %c0_i32_0 = arith.constant 0 : i32
    %c0_i32_1 = arith.constant 0 : i32
    return %arg0, %c0_i32, %c0_i32_0 : i32, i32, i32
  }
  func.func @transform_14(%arg0: i32) -> (i32, i32, i32, i32) {
    %c0_i32 = arith.constant 0 : i32
    %c0_i32_0 = arith.constant 0 : i32
    %c0_i32_1 = arith.constant 0 : i32
    %c0_i32_2 = arith.constant 0 : i32
    return %arg0, %c0_i32, %c0_i32_0, %c0_i32_1 : i32, i32, i32, i32
  }
}

</mosaic_0001>

<llo_original>
// kernel: tpu_custom_call.1
$region0: #{tpu_custom_call.1}
  #allocation0 [shape = 'u32[]', space=smem, size = 0x4, offset = 0x4, fixed_abs, tag = 'smem constant byte address 0x4 - core index']
  #allocation1 [shape = 'u32[144,128]{1,0:T(1,128)}', space=vmem, size = 0x12000, scoped, tag = 'internal scratch']
  %s0 = inlined_call_operand.hbm [shape: f32[2,8,32], index: 0, kind: input, shape index: {}]
  %s1 = inlined_call_operand.hbm [shape: f32[2,8,32], index: 1, kind: input, shape index: {}]
  %s2 = inlined_call_operand.hbm [shape: f32[2,8,32], index: 2, kind: input, shape index: {}]
  %s3 = inlined_call_operand.hbm [shape: f32[32,32], index: 3, kind: input, shape index: {}]
  %s4 = inlined_call_operand.hbm [shape: f32[32,32], index: 4, kind: input, shape index: {}]
  %s5 = inlined_call_operand.hbm [shape: f32[32,32], index: 5, kind: input, shape index: {}]
  %s6 = inlined_call_operand.vmem [shape: f32[1,32], index: 6, kind: input, shape index: {}]
  %s7 = inlined_call_operand.vmem [shape: f32[1,32], index: 7, kind: input, shape index: {}]
  %s8 = inlined_call_operand.hbm [shape: f32[1,32], index: 8, kind: input, shape index: {}]
  %s9 = inlined_call_operand.vmem [shape: f32[32,32], index: 9, kind: input, shape index: {}]
  %s10 = inlined_call_operand.vmem [shape: f32[1,32], index: 10, kind: input, shape index: {}]
  %s11 = inlined_call_operand.vmem [shape: f32[1,32], index: 11, kind: input, shape index: {}]
  %s12 = inlined_call_operand.vmem [shape: f32[1,32], index: 12, kind: input, shape index: {}]
  %s13 = inlined_call_operand.hbm [shape: f32[2,8,32], index: 13, kind: output, shape index: {0}]
  %s14 = inlined_call_operand.hbm [shape: f32[2,2,8,8], index: 14, kind: output, shape index: {1}]
  %15 = xla_tuple %s13, %s14
  %s16 = sld [smem:[#allocation0]]
  $region121: #{tpu_custom_call.1} parent=0
    _
  %s18 = ssub.s32 1, %s16
  %s19 = scalar_select 0, %s18, %s16
  $region1: #{tpu_custom_call.1} parent=0
    #allocation2 [shape = 'u8[8192]{0}', space=vmem, size = 0x2000, scoped, tag = 'input window, operand 0']
    #allocation3 [shape = 's32[2]{0}', space=sflag, size = 0x8, scoped, tag = 'scoped memory for tpu_custom_call.1']
    #allocation4 [shape = 's32[2]{0}', space=sflag, size = 0x8, scoped, tag = 'scoped memory for tpu_custom_call.1']
    #allocation5 [shape = 'u8[8192]{0}', space=vmem, size = 0x2000, scoped, tag = 'input window, operand 1']
    #allocation6 [shape = 's32[2]{0}', space=sflag, size = 0x8, scoped, tag = 'scoped memory for tpu_custom_call.1']
    #allocation7 [shape = 'u8[8192]{0}', space=vmem, size = 0x2000, scoped, tag = 'input window, operand 2']
    #allocation8 [shape = 'u8[16384]{0}', space=vmem, size = 0x4000, scoped, tag = 'input window, operand 3, single buffered']
    #allocation9 [shape = 's32[1]{0}', space=sflag, size = 0x4, scoped, tag = 'scoped memory for tpu_custom_call.1']
    #allocation10 [shape = 'u8[16384]{0}', space=vmem, size = 0x4000, scoped, tag = 'input window, operand 4, single buffered']
    #allocation11 [shape = 'u8[16384]{0}', space=vmem, size = 0x4000, scoped, tag = 'input window, operand 5, single buffered']
    #allocation12 [shape = 's32[1]{0}', space=sflag, size = 0x4, scoped, tag = 'scoped memory for tpu_custom_call.1']
    #allocation13 [shape = 'u8[512]{0}', space=vmem, size = 0x400, scoped, tag = 'input window, operand 8, single buffered']
    #allocation14 [shape = 'u8[8192]{0}', space=vmem, size = 0x2000, scoped, tag = 'output window, operand 0']
    #allocation15 [shape = 'u8[16384]{0}', space=vmem, size = 0x4000, scoped, tag = 'output window, operand 1']
    #allocation16 [shape = 's32[2]{0}', space=sflag, size = 0x8, scoped, tag = 'scoped memory for tpu_custom_call.1']
    %20 = vsyncpa [#allocation3], 0
    %s21 = scalar_lea.sflag [#allocation3], 1
    %22 = vsyncpa %s21, 0
    %23 = vsyncpa [#allocation6], 0
    %s24 = scalar_lea.sflag [#allocation6], 1
    %25 = vsyncpa %s24, 0
    %26 = vsyncpa [#allocation9], 0
    %27 = vsyncpa [#allocation12], 0
    %28 = vsyncpa [#allocation4], 0
    %s29 = scalar_lea.sflag [#allocation4], 1
    %30 = vsyncpa %s29, 0
    %31 = vsyncpa [#allocation16], 0
    %s32 = scalar_lea.sflag [#allocation16], 1
    %33 = vsyncpa %s32, 0
    loop: start=0, step=1, limit=4
    $region2: #{tpu_custom_call.1} parent=1 // loop_pre_header
      _
    $region3: #{tpu_custom_call.1} parent=1 // loop_header
      %s35 = sphi 0, %s39
      %p36 = scmp.ge.s32.totalorder %s35, 4
      %s45 = sphi 0, %s47
      %s48 = sphi 0, %s45
      %s49 = sphi 0, %s48
      %s65 = sphi 0, %s49
      %s71 = sphi 0, %s73
      %s74 = sphi 0, %s71
      %s75 = sphi 0, %s74
      %s91 = sphi 0, %s75
      %s97 = sphi 0, %s99
      %s100 = sphi 0, %s97
      %s101 = sphi 0, %s100
      %s117 = sphi 0, %s101
      %s121 = sphi 0, %s121
      %s123 = sphi 0, %s121
      %s124 = sphi 0, %s123
      %s138 = sphi 0, %s124
      %s142 = sphi 0, %s142
      %s144 = sphi 0, %s142
      %s145 = sphi 0, %s144
      %s159 = sphi 0, %s145
      %s163 = sphi 0, %s163
      %s165 = sphi 0, %s163
      %s166 = sphi 0, %s165
      %s180 = sphi 0, %s166
      %s184 = sphi 0, %s184
      %s186 = sphi 0, %s184
      %s187 = sphi 0, %s186
      %s201 = sphi 0, %s187
      %s205 = sphi 0, %s205
      %s207 = sphi 0, %s205
      %s208 = sphi 0, %s207
      %s222 = sphi 0, %s208
      %s226 = sphi 0, %s226
      %s228 = sphi 0, %s226
      %s229 = sphi 0, %s228
      %s243 = sphi 0, %s229
      %s247 = sphi 0, %s247
      %s249 = sphi 0, %s247
      %s250 = sphi 0, %s249
      %s264 = sphi 0, %s250
      %s268 = sphi 0, %s268
      %s270 = sphi 0, %s268
      %s271 = sphi 0, %s270
      %s285 = sphi 0, %s271
      %s289 = sphi 0, %s289
      %s291 = sphi 0, %s289
      %s292 = sphi 0, %s291
      %s306 = sphi 0, %s292
      %s310 = sphi 0, %s310
      %s312 = sphi 0, %s310
      %s313 = sphi 0, %s312
      %s327 = sphi 0, %s313
      %s333 = sphi 0, %s335
      %s336 = sphi 0, %s333
      %s337 = sphi 0, %s336
      %s353 = sphi 0, %s337
      %s359 = sphi 0, %s361
      %s362 = sphi 0, %s359
      %s363 = sphi 0, %s362
      %s379 = sphi 0, %s363
    $region4: #{tpu_custom_call.1} parent=1 // loop_header_branch
      %38 = sbr.rel (%p36) target = $region8
    $region5: #{tpu_custom_call.1} parent=1 // loop_body
      %s40 = ssub.s32 %s35, 1
      %s41 = ssub.s32 %s35, 2
      %s42 = sadd.s32 %s35, 1
      %s43 = ssub.s32 %s35, %s42
      %p44 = scmp.eq.s32.totalorder %s43, 0
      %s46 = sadd.s32 %s45, 1
      %s47 = scalar_select %p44, %s45, %s46
      %p50 = pneg %p44
      %p51 = scmp.eq.s32.totalorder %s35, 1
      %p52 = por %p50, %p51
      %p53 = scmp.ne.s32.totalorder %s45, %s48
      %p54 = scmp.eq.s32.totalorder %s35, 0
      %p55 = por %p53, %p54
      %p56 = scmp.ne.s32.totalorder %s45, %s48
      %p57 = scmp.eq.s32.totalorder %s40, 1
      %p58 = por %p56, %p57
      %p59 = scmp.ne.s32.totalorder %s48, %s49
      %p60 = scmp.eq.s32.totalorder %s40, 0
      %p61 = por %p59, %p60
      %p62 = scmp.ne.s32.totalorder %s48, %s49
      %p63 = scmp.eq.s32.totalorder %s41, 1
      %p64 = por %p62, %p63
      %p66 = scmp.ne.s32.totalorder %s49, %s65
      %p67 = scmp.eq.s32.totalorder %s41, 0
      %p68 = por %p66, %p67
      %s69 = ssub.s32 %s35, %s42
      %p70 = scmp.eq.s32.totalorder %s69, 0
      %s72 = sadd.s32 %s71, 1
      %s73 = scalar_select %p70, %s71, %s72
      %p76 = pneg %p70
      %p77 = scmp.eq.s32.totalorder %s35, 1
      %p78 = por %p76, %p77
      %p79 = scmp.ne.s32.totalorder %s71, %s74
      %p80 = scmp.eq.s32.totalorder %s35, 0
      %p81 = por %p79, %p80
      %p82 = scmp.ne.s32.totalorder %s71, %s74
      %p83 = scmp.eq.s32.totalorder %s40, 1
      %p84 = por %p82, %p83
      %p85 = scmp.ne.s32.totalorder %s74, %s75
      %p86 = scmp.eq.s32.totalorder %s40, 0
      %p87 = por %p85, %p86
      %p88 = scmp.ne.s32.totalorder %s74, %s75
      %p89 = scmp.eq.s32.totalorder %s41, 1
      %p90 = por %p88, %p89
      %p92 = scmp.ne.s32.totalorder %s75, %s91
      %p93 = scmp.eq.s32.totalorder %s41, 0
      %p94 = por %p92, %p93
      %s95 = ssub.s32 %s35, %s42
      %p96 = scmp.eq.s32.totalorder %s95, 0
      %s98 = sadd.s32 %s97, 1
      %s99 = scalar_select %p96, %s97, %s98
      %p102 = pneg %p96
      %p103 = scmp.eq.s32.totalorder %s35, 1
      %p104 = por %p102, %p103
      %p105 = scmp.ne.s32.totalorder %s97, %s100
      %p106 = scmp.eq.s32.totalorder %s35, 0
      %p107 = por %p105, %p106
      %p108 = scmp.ne.s32.totalorder %s97, %s100
      %p109 = scmp.eq.s32.totalorder %s40, 1
      %p110 = por %p108, %p109
      %p111 = scmp.ne.s32.totalorder %s100, %s101
      %p112 = scmp.eq.s32.totalorder %s40, 0
      %p113 = por %p111, %p112
      %p114 = scmp.ne.s32.totalorder %s100, %s101
      %p115 = scmp.eq.s32.totalorder %s41, 1
      %p116 = por %p114, %p115
      %p118 = scmp.ne.s32.totalorder %s101, %s117
      %p119 = scmp.eq.s32.totalorder %s41, 0
      %p120 = por %p118, %p119
      %s122 = sadd.s32 %s121, 1
      %p125 = scmp.eq.s32.totalorder %s35, 1
      %p126 = scmp.ne.s32.totalorder %s121, %s123
      %p127 = scmp.eq.s32.totalorder %s35, 0
      %p128 = por %p126, %p127
      %p129 = scmp.ne.s32.totalorder %s121, %s123
      %p130 = scmp.eq.s32.totalorder %s40, 1
      %p131 = por %p129, %p130
      %p132 = scmp.ne.s32.totalorder %s123, %s124
      %p133 = scmp.eq.s32.totalorder %s40, 0
      %p134 = por %p132, %p133
      %p135 = scmp.ne.s32.totalorder %s123, %s124
      %p136 = scmp.eq.s32.totalorder %s41, 1
      %p137 = por %p135, %p136
      %p139 = scmp.ne.s32.totalorder %s124, %s138
      %p140 = scmp.eq.s32.totalorder %s41, 0
      %p141 = por %p139, %p140
      %s143 = sadd.s32 %s142, 1
      %p146 = scmp.eq.s32.totalorder %s35, 1
      %p147 = scmp.ne.s32.totalorder %s142, %s144
      %p148 = scmp.eq.s32.totalorder %s35, 0
      %p149 = por %p147, %p148
      %p150 = scmp.ne.s32.totalorder %s142, %s144
      %p151 = scmp.eq.s32.totalorder %s40, 1
      %p152 = por %p150, %p151
      %p153 = scmp.ne.s32.totalorder %s144, %s145
      %p154 = scmp.eq.s32.totalorder %s40, 0
      %p155 = por %p153, %p154
      %p156 = scmp.ne.s32.totalorder %s144, %s145
      %p157 = scmp.eq.s32.totalorder %s41, 1
      %p158 = por %p156, %p157
      %p160 = scmp.ne.s32.totalorder %s145, %s159
      %p161 = scmp.eq.s32.totalorder %s41, 0
      %p162 = por %p160, %p161
      %s164 = sadd.s32 %s163, 1
      %p167 = scmp.eq.s32.totalorder %s35, 1
      %p168 = scmp.ne.s32.totalorder %s163, %s165
      %p169 = scmp.eq.s32.totalorder %s35, 0
      %p170 = por %p168, %p169
      %p171 = scmp.ne.s32.totalorder %s163, %s165
      %p172 = scmp.eq.s32.totalorder %s40, 1
      %p173 = por %p171, %p172
      %p174 = scmp.ne.s32.totalorder %s165, %s166
      %p175 = scmp.eq.s32.totalorder %s40, 0
      %p176 = por %p174, %p175
      %p177 = scmp.ne.s32.totalorder %s165, %s166
      %p178 = scmp.eq.s32.totalorder %s41, 1
      %p179 = por %p177, %p178
      %p181 = scmp.ne.s32.totalorder %s166, %s180
      %p182 = scmp.eq.s32.totalorder %s41, 0
      %p183 = por %p181, %p182
      %s185 = sadd.s32 %s184, 1
      %p188 = scmp.eq.s32.totalorder %s35, 1
      %p189 = scmp.ne.s32.totalorder %s184, %s186
      %p190 = scmp.eq.s32.totalorder %s35, 0
      %p191 = por %p189, %p190
      %p192 = scmp.ne.s32.totalorder %s184, %s186
      %p193 = scmp.eq.s32.totalorder %s40, 1
      %p194 = por %p192, %p193
      %p195 = scmp.ne.s32.totalorder %s186, %s187
      %p196 = scmp.eq.s32.totalorder %s40, 0
      %p197 = por %p195, %p196
      %p198 = scmp.ne.s32.totalorder %s186, %s187
      %p199 = scmp.eq.s32.totalorder %s41, 1
      %p200 = por %p198, %p199
      %p202 = scmp.ne.s32.totalorder %s187, %s201
      %p203 = scmp.eq.s32.totalorder %s41, 0
      %p204 = por %p202, %p203
      %s206 = sadd.s32 %s205, 1
      %p209 = scmp.eq.s32.totalorder %s35, 1
      %p210 = scmp.ne.s32.totalorder %s205, %s207
      %p211 = scmp.eq.s32.totalorder %s35, 0
      %p212 = por %p210, %p211
      %p213 = scmp.ne.s32.totalorder %s205, %s207
      %p214 = scmp.eq.s32.totalorder %s40, 1
      %p215 = por %p213, %p214
      %p216 = scmp.ne.s32.totalorder %s207, %s208
      %p217 = scmp.eq.s32.totalorder %s40, 0
      %p218 = por %p216, %p217
      %p219 = scmp.ne.s32.totalorder %s207, %s208
      %p220 = scmp.eq.s32.totalorder %s41, 1
      %p221 = por %p219, %p220
      %p223 = scmp.ne.s32.totalorder %s208, %s222
      %p224 = scmp.eq.s32.totalorder %s41, 0
      %p225 = por %p223, %p224
      %s227 = sadd.s32 %s226, 1
      %p230 = scmp.eq.s32.totalorder %s35, 1
      %p231 = scmp.ne.s32.totalorder %s226, %s228
      %p232 = scmp.eq.s32.totalorder %s35, 0
      %p233 = por %p231, %p232
      %p234 = scmp.ne.s32.totalorder %s226, %s228
      %p235 = scmp.eq.s32.totalorder %s40, 1
      %p236 = por %p234, %p235
      %p237 = scmp.ne.s32.totalorder %s228, %s229
      %p238 = scmp.eq.s32.totalorder %s40, 0
      %p239 = por %p237, %p238
      %p240 = scmp.ne.s32.totalorder %s228, %s229
      %p241 = scmp.eq.s32.totalorder %s41, 1
      %p242 = por %p240, %p241
      %p244 = scmp.ne.s32.totalorder %s229, %s243
      %p245 = scmp.eq.s32.totalorder %s41, 0
      %p246 = por %p244, %p245
      %s248 = sadd.s32 %s247, 1
      %p251 = scmp.eq.s32.totalorder %s35, 1
      %p252 = scmp.ne.s32.totalorder %s247, %s249
      %p253 = scmp.eq.s32.totalorder %s35, 0
      %p254 = por %p252, %p253
      %p255 = scmp.ne.s32.totalorder %s247, %s249
      %p256 = scmp.eq.s32.totalorder %s40, 1
      %p257 = por %p255, %p256
      %p258 = scmp.ne.s32.totalorder %s249, %s250
      %p259 = scmp.eq.s32.totalorder %s40, 0
      %p260 = por %p258, %p259
      %p261 = scmp.ne.s32.totalorder %s249, %s250
      %p262 = scmp.eq.s32.totalorder %s41, 1
      %p263 = por %p261, %p262
      %p265 = scmp.ne.s32.totalorder %s250, %s264
      %p266 = scmp.eq.s32.totalorder %s41, 0
      %p267 = por %p265, %p266
      %s269 = sadd.s32 %s268, 1
      %p272 = scmp.eq.s32.totalorder %s35, 1
      %p273 = scmp.ne.s32.totalorder %s268, %s270
      %p274 = scmp.eq.s32.totalorder %s35, 0
      %p275 = por %p273, %p274
      %p276 = scmp.ne.s32.totalorder %s268, %s270
      %p277 = scmp.eq.s32.totalorder %s40, 1
      %p278 = por %p276, %p277
      %p279 = scmp.ne.s32.totalorder %s270, %s271
      %p280 = scmp.eq.s32.totalorder %s40, 0
      %p281 = por %p279, %p280
      %p282 = scmp.ne.s32.totalorder %s270, %s271
      %p283 = scmp.eq.s32.totalorder %s41, 1
      %p284 = por %p282, %p283
      %p286 = scmp.ne.s32.totalorder %s271, %s285
      %p287 = scmp.eq.s32.totalorder %s41, 0
      %p288 = por %p286, %p287
      %s290 = sadd.s32 %s289, 1
      %p293 = scmp.eq.s32.totalorder %s35, 1
      %p294 = scmp.ne.s32.totalorder %s289, %s291
      %p295 = scmp.eq.s32.totalorder %s35, 0
      %p296 = por %p294, %p295
      %p297 = scmp.ne.s32.totalorder %s289, %s291
      %p298 = scmp.eq.s32.totalorder %s40, 1
      %p299 = por %p297, %p298
      %p300 = scmp.ne.s32.totalorder %s291, %s292
      %p301 = scmp.eq.s32.totalorder %s40, 0
      %p302 = por %p300, %p301
      %p303 = scmp.ne.s32.totalorder %s291, %s292
      %p304 = scmp.eq.s32.totalorder %s41, 1
      %p305 = por %p303, %p304
      %p307 = scmp.ne.s32.totalorder %s292, %s306
      %p308 = scmp.eq.s32.totalorder %s41, 0
      %p309 = por %p307, %p308
      %s311 = sadd.s32 %s310, 1
      %p314 = scmp.eq.s32.totalorder %s35, 1
      %p315 = scmp.ne.s32.totalorder %s310, %s312
      %p316 = scmp.eq.s32.totalorder %s35, 0
      %p317 = por %p315, %p316
      %p318 = scmp.ne.s32.totalorder %s310, %s312
      %p319 = scmp.eq.s32.totalorder %s40, 1
      %p320 = por %p318, %p319
      %p321 = scmp.ne.s32.totalorder %s312, %s313
      %p322 = scmp.eq.s32.totalorder %s40, 0
      %p323 = por %p321, %p322
      %p324 = scmp.ne.s32.totalorder %s312, %s313
      %p325 = scmp.eq.s32.totalorder %s41, 1
      %p326 = por %p324, %p325
      %p328 = scmp.ne.s32.totalorder %s313, %s327
      %p329 = scmp.eq.s32.totalorder %s41, 0
      %p330 = por %p328, %p329
      %s331 = ssub.s32 %s35, %s42
      %p332 = scmp.eq.s32.totalorder %s331, 0
      %s334 = sadd.s32 %s333, 1
      %s335 = scalar_select %p332, %s333, %s334
      %p338 = pneg %p332
      %p339 = scmp.eq.s32.totalorder %s35, 1
      %p340 = por %p338, %p339
      %p341 = scmp.ne.s32.totalorder %s333, %s336
      %p342 = scmp.eq.s32.totalorder %s35, 0
      %p343 = por %p341, %p342
      %p344 = scmp.ne.s32.totalorder %s333, %s336
      %p345 = scmp.eq.s32.totalorder %s40, 1
      %p346 = por %p344, %p345
      %p347 = scmp.ne.s32.totalorder %s336, %s337
      %p348 = scmp.eq.s32.totalorder %s40, 0
      %p349 = por %p347, %p348
      %p350 = scmp.ne.s32.totalorder %s336, %s337
      %p351 = scmp.eq.s32.totalorder %s41, 1
      %p352 = por %p350, %p351
      %p354 = scmp.ne.s32.totalorder %s337, %s353
      %p355 = scmp.eq.s32.totalorder %s41, 0
      %p356 = por %p354, %p355
      %s357 = ssub.s32 %s35, %s42
      %p358 = scmp.eq.s32.totalorder %s357, 0
      %s360 = sadd.s32 %s359, 1
      %s361 = scalar_select %p358, %s359, %s360
      %p364 = pneg %p358
      %p365 = scmp.eq.s32.totalorder %s35, 1
      %p366 = por %p364, %p365
      %p367 = scmp.ne.s32.totalorder %s359, %s362
      %p368 = scmp.eq.s32.totalorder %s35, 0
      %p369 = por %p367, %p368
      %p370 = scmp.ne.s32.totalorder %s359, %s362
      %p371 = scmp.eq.s32.totalorder %s40, 1
      %p372 = por %p370, %p371
      %p373 = scmp.ne.s32.totalorder %s362, %s363
      %p374 = scmp.eq.s32.totalorder %s40, 0
      %p375 = por %p373, %p374
      %p376 = scmp.ne.s32.totalorder %s362, %s363
      %p377 = scmp.eq.s32.totalorder %s41, 1
      %p378 = por %p376, %p377
      %p380 = scmp.ne.s32.totalorder %s363, %s379
      %p381 = scmp.eq.s32.totalorder %s41, 0
      %p382 = por %p380, %p381
      %p383 = scmp.le.s32.totalorder 1, %s35
      %p384 = scmp.lt.s32.totalorder %s35, 3
      %p385 = pnand %p383, %p384
      %p386 = pneg %p385
      // Predicated region
      $region9: #{tpu_custom_call.1} parent=5 // pred_check
        _
      $region10: #{tpu_custom_call.1} parent=5 // pred_check_branch
        %388 = sbr.rel (%p385) target = $region12
      $region11: #{tpu_custom_call.1} parent=5 // pred_region
        %s389 = ssub.s32 %s35, 1
        // Predicated region
        $region13: #{tpu_custom_call.1} parent=11 // pred_check
          %p390 = pneg %p134
        $region14: #{tpu_custom_call.1} parent=11 // pred_check_branch
          %392 = sbr.rel (%p390) target = $region16
        $region15: #{tpu_custom_call.1} parent=11 // pred_region
          %s394 = ssub.s32 512, 512
          %395 = vsyncadd [#allocation9], %s394
          %s396 = sshll.u32 [#allocation8], 4
          %s397 = int_to_ptr.vmem [resolvable:$true] %s396
          %402 = dma.hbm_to_vmem [thread:$0]  %s3, 512, %s397, [#allocation9], 128, 128, 8
        $region16: #{tpu_custom_call.1} parent=11 // pred_fallthru
          _
        // Predicated region
        $region17: #{tpu_custom_call.1} parent=11 // pred_check
          %p403 = pneg %p155
        $region18: #{tpu_custom_call.1} parent=11 // pred_check_branch
          %405 = sbr.rel (%p403) target = $region20
        $region19: #{tpu_custom_call.1} parent=11 // pred_region
          %s407 = ssub.s32 512, 512
          %408 = vsyncadd [#allocation9], %s407
          %s409 = sshll.u32 [#allocation10], 4
          %s410 = int_to_ptr.vmem [resolvable:$true] %s409
          %415 = dma.hbm_to_vmem [thread:$0]  %s4, 512, %s410, [#allocation9], 128, 128, 8
        $region20: #{tpu_custom_call.1} parent=11 // pred_fallthru
          _
        // Predicated region
        $region21: #{tpu_custom_call.1} parent=11 // pred_check
          %p416 = pneg %p176
        $region22: #{tpu_custom_call.1} parent=11 // pred_check_branch
          %418 = sbr.rel (%p416) target = $region24
        $region23: #{tpu_custom_call.1} parent=11 // pred_region
          %s420 = ssub.s32 512, 512
          %421 = vsyncadd [#allocation12], %s420
          %s422 = sshll.u32 [#allocation11], 4
          %s423 = int_to_ptr.vmem [resolvable:$true] %s422
          %428 = dma.hbm_to_vmem [thread:$0]  %s5, 512, %s423, [#allocation12], 128, 128, 8
        $region24: #{tpu_custom_call.1} parent=11 // pred_fallthru
          _
        // Predicated region
        $region25: #{tpu_custom_call.1} parent=11 // pred_check
          %p429 = pneg %p197
        $region26: #{tpu_custom_call.1} parent=11 // pred_check_branch
          %431 = sbr.rel (%p429) target = $region28
        $region27: #{tpu_custom_call.1} parent=11 // pred_region
          _
        $region28: #{tpu_custom_call.1} parent=11 // pred_fallthru
          _
        // Predicated region
        $region29: #{tpu_custom_call.1} parent=11 // pred_check
          %p432 = pneg %p218
        $region30: #{tpu_custom_call.1} parent=11 // pred_check_branch
          %434 = sbr.rel (%p432) target = $region32
        $region31: #{tpu_custom_call.1} parent=11 // pred_region
          _
        $region32: #{tpu_custom_call.1} parent=11 // pred_fallthru
          _
        // Predicated region
        $region33: #{tpu_custom_call.1} parent=11 // pred_check
          %p435 = pneg %p239
        $region34: #{tpu_custom_call.1} parent=11 // pred_check_branch
          %437 = sbr.rel (%p435) target = $region36
        $region35: #{tpu_custom_call.1} parent=11 // pred_region
          %s439 = ssub.s32 16, 16
          %440 = vsyncadd [#allocation12], %s439
          %s442 = sshll.u32 [#allocation13], 4
          %s443 = int_to_ptr.vmem [resolvable:$true] %s442
          %445 = dma.hbm_to_vmem [thread:$0]  %s8, 16, %s443, [#allocation12]
        $region36: #{tpu_custom_call.1} parent=11 // pred_fallthru
          _
        // Predicated region
        $region37: #{tpu_custom_call.1} parent=11 // pred_check
          %p446 = pneg %p260
        $region38: #{tpu_custom_call.1} parent=11 // pred_check_branch
          %448 = sbr.rel (%p446) target = $region40
        $region39: #{tpu_custom_call.1} parent=11 // pred_region
          _
        $region40: #{tpu_custom_call.1} parent=11 // pred_fallthru
          _
        // Predicated region
        $region41: #{tpu_custom_call.1} parent=11 // pred_check
          %p449 = pneg %p281
        $region42: #{tpu_custom_call.1} parent=11 // pred_check_branch
          %451 = sbr.rel (%p449) target = $region44
        $region43: #{tpu_custom_call.1} parent=11 // pred_region
          _
        $region44: #{tpu_custom_call.1} parent=11 // pred_fallthru
          _
        // Predicated region
        $region45: #{tpu_custom_call.1} parent=11 // pred_check
          %p452 = pneg %p302
        $region46: #{tpu_custom_call.1} parent=11 // pred_check_branch
          %454 = sbr.rel (%p452) target = $region48
        $region47: #{tpu_custom_call.1} parent=11 // pred_region
          _
        $region48: #{tpu_custom_call.1} parent=11 // pred_fallthru
          _
        // Predicated region
        $region49: #{tpu_custom_call.1} parent=11 // pred_check
          %p455 = pneg %p323
        $region50: #{tpu_custom_call.1} parent=11 // pred_check_branch
          %457 = sbr.rel (%p455) target = $region52
        $region51: #{tpu_custom_call.1} parent=11 // pred_region
          _
        $region52: #{tpu_custom_call.1} parent=11 // pred_fallthru
          _
      $region12: #{tpu_custom_call.1} parent=5 // pred_fallthru
        _
      %p458 = scmp.lt.s32.totalorder %s35, 2
      // Predicated region
      $region53: #{tpu_custom_call.1} parent=5 // pred_check
        %p459 = pneg %p458
      $region54: #{tpu_custom_call.1} parent=5 // pred_check_branch
        %461 = sbr.rel (%p459) target = $region56
      $region55: #{tpu_custom_call.1} parent=5 // pred_region
        // Predicated region
        $region57: #{tpu_custom_call.1} parent=55 // pred_check
          %p462 = pneg %p55
        $region58: #{tpu_custom_call.1} parent=55 // pred_check_branch
          %464 = sbr.rel (%p462) target = $region60
        $region59: #{tpu_custom_call.1} parent=55 // pred_region
          %s465 = sand.u32 %s45, 1
          %s466 = scalar_lea.sflag [#allocation3], %s465
          %s467 = sand.u32 %s45, 1
          %s468 = smul.addr %s467, 8
          %s469 = scalar_lea.vmem [#allocation2], %s468
          %s471 = ssub.s32 128, 128
          %472 = vsyncadd %s466, %s471
          %s473 = smul.addr %s35, 128
          %s474 = scalar_lea.hbm %s0, %s473
          %s476 = sshll.u32 %s469, 4
          %s477 = int_to_ptr.vmem [resolvable:$true] %s476
          %479 = dma.hbm_to_vmem [thread:$0]  %s474, 128, %s477, %s466
        $region60: #{tpu_custom_call.1} parent=55 // pred_fallthru
          _
        // Predicated region
        $region61: #{tpu_custom_call.1} parent=55 // pred_check
          %p480 = pneg %p81
        $region62: #{tpu_custom_call.1} parent=55 // pred_check_branch
          %482 = sbr.rel (%p480) target = $region64
        $region63: #{tpu_custom_call.1} parent=55 // pred_region
          %s483 = sand.u32 %s35, 1
          %s484 = scalar_lea.sflag [#allocation6], %s483
          %s485 = sand.u32 %s71, 1
          %s486 = smul.addr %s485, 8
          %s487 = scalar_lea.vmem [#allocation5], %s486
          %s489 = ssub.s32 128, 128
          %490 = vsyncadd %s484, %s489
          %s491 = smul.addr %s35, 128
          %s492 = scalar_lea.hbm %s1, %s491
          %s494 = sshll.u32 %s487, 4
          %s495 = int_to_ptr.vmem [resolvable:$true] %s494
          %497 = dma.hbm_to_vmem [thread:$0]  %s492, 128, %s495, %s484
        $region64: #{tpu_custom_call.1} parent=55 // pred_fallthru
          _
        // Predicated region
        $region65: #{tpu_custom_call.1} parent=55 // pred_check
          %p498 = pneg %p107
        $region66: #{tpu_custom_call.1} parent=55 // pred_check_branch
          %500 = sbr.rel (%p498) target = $region68
        $region67: #{tpu_custom_call.1} parent=55 // pred_region
          %s501 = sand.u32 %s35, 1
          %s502 = scalar_lea.sflag [#allocation6], %s501
          %s503 = sand.u32 %s97, 1
          %s504 = smul.addr %s503, 8
          %s505 = scalar_lea.vmem [#allocation7], %s504
          %s507 = ssub.s32 128, 128
          %508 = vsyncadd %s502, %s507
          %s509 = smul.addr %s35, 128
          %s510 = scalar_lea.hbm %s2, %s509
          %s512 = sshll.u32 %s505, 4
          %s513 = int_to_ptr.vmem [resolvable:$true] %s512
          %515 = dma.hbm_to_vmem [thread:$0]  %s510, 128, %s513, %s502
        $region68: #{tpu_custom_call.1} parent=55 // pred_fallthru
          _
      $region56: #{tpu_custom_call.1} parent=5 // pred_fallthru
        _
      %p516 = scmp.le.s32.totalorder 1, %s35
      %p517 = scmp.lt.s32.totalorder %s35, 3
      %p518 = pnand %p516, %p517
      %p519 = pneg %p518
      // Predicated region
      $region69: #{tpu_custom_call.1} parent=5 // pred_check
        _
      $region70: #{tpu_custom_call.1} parent=5 // pred_check_branch
        %521 = sbr.rel (%p518) target = $region72
      $region71: #{tpu_custom_call.1} parent=5 // pred_region
        %s522 = ssub.s32 %s35, 1
        %s523 = sand.u32 %s48, 1
        %s524 = scalar_lea.sflag [#allocation3], %s523
        %s525 = sand.u32 %s48, 1
        %s526 = smul.addr %s525, 8
        %s527 = scalar_lea.vmem [#allocation2], %s526
        // Predicated region
        $region73: #{tpu_custom_call.1} parent=71 // pred_check
          %p528 = pneg %p61
        $region74: #{tpu_custom_call.1} parent=71 // pred_check_branch
          %530 = sbr.rel (%p528) target = $region76
        $region75: #{tpu_custom_call.1} parent=71 // pred_region
          %531 = dma.done %s524, 128
        $region76: #{tpu_custom_call.1} parent=71 // pred_fallthru
          _
        %s532 = sand.u32 %s40, 1
        %s533 = scalar_lea.sflag [#allocation6], %s532
        %s534 = sand.u32 %s74, 1
        %s535 = smul.addr %s534, 8
        %s536 = scalar_lea.vmem [#allocation5], %s535
        // Predicated region
        $region77: #{tpu_custom_call.1} parent=71 // pred_check
          %p537 = pneg %p87
        $region78: #{tpu_custom_call.1} parent=71 // pred_check_branch
          %539 = sbr.rel (%p537) target = $region80
        $region79: #{tpu_custom_call.1} parent=71 // pred_region
          %540 = dma.done %s533, 128
        $region80: #{tpu_custom_call.1} parent=71 // pred_fallthru
          _
        %s541 = sand.u32 %s40, 1
        %s542 = scalar_lea.sflag [#allocation6], %s541
        %s543 = sand.u32 %s100, 1
        %s544 = smul.addr %s543, 8
        %s545 = scalar_lea.vmem [#allocation7], %s544
        // Predicated region
        $region81: #{tpu_custom_call.1} parent=71 // pred_check
          %p546 = pneg %p113
        $region82: #{tpu_custom_call.1} parent=71 // pred_check_branch
          %548 = sbr.rel (%p546) target = $region84
        $region83: #{tpu_custom_call.1} parent=71 // pred_region
          %549 = dma.done %s542, 128
        $region84: #{tpu_custom_call.1} parent=71 // pred_fallthru
          _
        // Predicated region
        $region85: #{tpu_custom_call.1} parent=71 // pred_check
          %p550 = pneg %p134
        $region86: #{tpu_custom_call.1} parent=71 // pred_check_branch
          %552 = sbr.rel (%p550) target = $region88
        $region87: #{tpu_custom_call.1} parent=71 // pred_region
          %553 = dma.done [#allocation9], 512
        $region88: #{tpu_custom_call.1} parent=71 // pred_fallthru
          _
        // Predicated region
        $region89: #{tpu_custom_call.1} parent=71 // pred_check
          %p554 = pneg %p155
        $region90: #{tpu_custom_call.1} parent=71 // pred_check_branch
          %556 = sbr.rel (%p554) target = $region92
        $region91: #{tpu_custom_call.1} parent=71 // pred_region
          %557 = dma.done [#allocation9], 512
        $region92: #{tpu_custom_call.1} parent=71 // pred_fallthru
          _
        // Predicated region
        $region93: #{tpu_custom_call.1} parent=71 // pred_check
          %p558 = pneg %p176
        $region94: #{tpu_custom_call.1} parent=71 // pred_check_branch
          %560 = sbr.rel (%p558) target = $region96
        $region95: #{tpu_custom_call.1} parent=71 // pred_region
          %561 = dma.done [#allocation12], 512
        $region96: #{tpu_custom_call.1} parent=71 // pred_fallthru
          _
        // Predicated region
        $region97: #{tpu_custom_call.1} parent=71 // pred_check
          %p562 = pneg %p239
        $region98: #{tpu_custom_call.1} parent=71 // pred_check_branch
          %564 = sbr.rel (%p562) target = $region100
        $region99: #{tpu_custom_call.1} parent=71 // pred_region
          %565 = dma.done [#allocation12], 16
        $region100: #{tpu_custom_call.1} parent=71 // pred_fallthru
          _
        %s566 = sand.u32 %s48, 1
        %s567 = scalar_lea.sflag [#allocation3], %s566
        %s568 = sand.u32 %s48, 1
        %s569 = smul.addr %s568, 8
        %s570 = scalar_lea.vmem [#allocation2], %s569
        %p571 = pneg %p61
        %p572 = pneg %p58
        %s573 = sand.u32 %s40, 1
        %s574 = scalar_lea.sflag [#allocation6], %s573
        %s575 = sand.u32 %s74, 1
        %s576 = smul.addr %s575, 8
        %s577 = scalar_lea.vmem [#allocation5], %s576
        %p578 = pneg %p87
        %p579 = pneg %p84
        %s580 = sand.u32 %s40, 1
        %s581 = scalar_lea.sflag [#allocation6], %s580
        %s582 = sand.u32 %s100, 1
        %s583 = smul.addr %s582, 8
        %s584 = scalar_lea.vmem [#allocation7], %s583
        %p585 = pneg %p113
        %p586 = pneg %p110
        %p587 = pneg %p134
        %p588 = pneg %p131
        %p589 = pneg %p155
        %p590 = pneg %p152
        %p591 = pneg %p176
        %p592 = pneg %p173
        %p593 = pneg %p197
        %p594 = pneg %p194
        %p595 = pneg %p218
        %p596 = pneg %p215
        %p597 = pneg %p239
        %p598 = pneg %p236
        %p599 = pneg %p260
        %p600 = pneg %p257
        %p601 = pneg %p281
        %p602 = pneg %p278
        %p603 = pneg %p302
        %p604 = pneg %p299
        %p605 = pneg %p323
        %p606 = pneg %p320
        %p607 = pneg %p349
        %p608 = pneg %p346
        %s609 = sand.u32 %s336, 1
        %s610 = scalar_lea.sflag [#allocation4], %s609
        %s611 = sand.u32 %s336, 1
        %s612 = smul.addr %s611, 8
        %s613 = scalar_lea.vmem [#allocation14], %s612
        %p614 = pneg %p375
        %p615 = pneg %p372
        %s616 = sand.u32 %s362, 1
        %s617 = scalar_lea.sflag [#allocation16], %s616
        %s618 = sand.u32 %s362, 1
        %s619 = smul.addr %s618, 16
        %s620 = scalar_lea.vmem [#allocation15], %s619
        %v622 = vld [vmem:[%s527] sm:$0xff]
        %v623 = vld [vmem:[%s536] sm:$0xff]
        %v624 = vld [vmem:[%s545] sm:$0xff]
        %v625 = vpack.c.bf16 %v622, %v622
        %v626 = vld [vmem:[#allocation8] sm:$0xff]
        %v627 = vld [vmem:[#allocation8 + $0x8] sm:$0xff]
        %v628 = vld [vmem:[#allocation8 + $0x10] sm:$0xff]
        %v629 = vld [vmem:[#allocation8 + $0x18] sm:$0xff]
        %v630 = vpack.c.bf16 %v627, %v626
        %v631 = vpack.c.bf16 %v629, %v628
        %v632 = vld [vmem:[%s6] sm:$0x1]
        %v634 = vlaneseq
        %v635 = vshrl.u32 %v634, 7
        %v636 = vsub.s32 0, %v635
        %v637 = vrot.slane %v632, %v636
        %vm639 = vcmask 261120
        %v641 = vsel %vm639, %v625, 0
        %643 = vmatprep.subr.bf16.mxu0 0
        %644 = vmatpush1.bf16.msra.mxu0 %v630
        %645 = vmatprep.subr.bf16.mxu0 0
        %646 = vmatpush1.bf16.msra.mxu0 %v631
        %647 = vmatprep.subr.bf16.mxu0 0
        %648 = vmatpush1.bf16.msra.mxu0 0
        %649 = vmatprep.subr.bf16.mxu0 0
        %650 = vmatpush1.bf16.msra.mxu0 0
        %651 = vmatprep.subr.bf16.mxu0 0
        %652 = vmatpush1.bf16.msra.mxu0 0
        %653 = vmatprep.subr.bf16.mxu0 0
        %654 = vmatpush1.bf16.msra.mxu0 0
        %655 = vmatprep.subr.bf16.mxu0 0
        %656 = vmatpush1.bf16.msra.mxu0 0
        %657 = vmatprep.subr.bf16.mxu0 0
        %658 = vmatpush1.bf16.msra.mxu0 0
        %659 = vmatprep.subr.bf16.mxu0 0
        %660 = vmatpush1.bf16.msra.mxu0 0
        %661 = vmatprep.subr.bf16.mxu0 0
        %662 = vmatpush1.bf16.msra.mxu0 0
        %663 = vmatprep.subr.bf16.mxu0 0
        %664 = vmatpush1.bf16.msra.mxu0 0
        %665 = vmatprep.subr.bf16.mxu0 0
        %666 = vmatpush1.bf16.msra.mxu0 0
        %667 = vmatprep.subr.bf16.mxu0 0
        %668 = vmatpush1.bf16.msra.mxu0 0
        %669 = vmatprep.subr.bf16.mxu0 0
        %670 = vmatpush1.bf16.msra.mxu0 0
        %671 = vmatprep.subr.bf16.mxu0 0
        %672 = vmatpush1.bf16.msra.mxu0 0
        %673 = vmatprep.subr.bf16.mxu0 0
        %674 = vmatpush1.bf16.msra.mxu0 0
        %675 = vmatprep.mubr.bf16.mxu0 0
        %676 = vmatmul.mubr.bf16.gmra.mrb[0].mxu0 %v641
        %v677 = vpop.f32.mrb[0].mxu0
        %v678 = vadd.f32 %v637, %v677
        %v679 = vpop.f32.mrb[0].mxu0
        %v680 = vpop.f32.mrb[0].mxu0
        %v681 = vpop.f32.mrb[0].mxu0
        %682 = vdwg.mxu0
        %v683 = vpack.c.bf16 %v623, %v623
        %v684 = vld [vmem:[#allocation10] sm:$0xff]
        %v685 = vld [vmem:[#allocation10 + $0x8] sm:$0xff]
        %v686 = vld [vmem:[#allocation10 + $0x10] sm:$0xff]
        %v687 = vld [vmem:[#allocation10 + $0x18] sm:$0xff]
        %v688 = vpack.c.bf16 %v685, %v684
        %v689 = vpack.c.bf16 %v687, %v686
        %v690 = vld [vmem:[%s7] sm:$0x1]
        %v692 = vlaneseq
        %v693 = vshrl.u32 %v692, 7
        %v694 = vsub.s32 0, %v693
        %v695 = vrot.slane %v690, %v694
        %v698 = vsel %vm639, %v683, 0
        %700 = vmatprep.subr.bf16.mxu0 0
        %701 = vmatpush1.bf16.msra.mxu0 %v688
        %702 = vmatprep.subr.bf16.mxu0 0
        %703 = vmatpush1.bf16.msra.mxu0 %v689
        %704 = vmatprep.subr.bf16.mxu0 0
        %705 = vmatpush1.bf16.msra.mxu0 0
        %706 = vmatprep.subr.bf16.mxu0 0
        %707 = vmatpush1.bf16.msra.mxu0 0
        %708 = vmatprep.subr.bf16.mxu0 0
        %709 = vmatpush1.bf16.msra.mxu0 0
        %710 = vmatprep.subr.bf16.mxu0 0
        %711 = vmatpush1.bf16.msra.mxu0 0
        %712 = vmatprep.subr.bf16.mxu0 0
        %713 = vmatpush1.bf16.msra.mxu0 0
        %714 = vmatprep.subr.bf16.mxu0 0
        %715 = vmatpush1.bf16.msra.mxu0 0
        %716 = vmatprep.subr.bf16.mxu0 0
        %717 = vmatpush1.bf16.msra.mxu0 0
        %718 = vmatprep.subr.bf16.mxu0 0
        %719 = vmatpush1.bf16.msra.mxu0 0
        %720 = vmatprep.subr.bf16.mxu0 0
        %721 = vmatpush1.bf16.msra.mxu0 0
        %722 = vmatprep.subr.bf16.mxu0 0
        %723 = vmatpush1.bf16.msra.mxu0 0
        %724 = vmatprep.subr.bf16.mxu0 0
        %725 = vmatpush1.bf16.msra.mxu0 0
        %726 = vmatprep.subr.bf16.mxu0 0
        %727 = vmatpush1.bf16.msra.mxu0 0
        %728 = vmatprep.subr.bf16.mxu0 0
        %729 = vmatpush1.bf16.msra.mxu0 0
        %730 = vmatprep.subr.bf16.mxu0 0
        %731 = vmatpush1.bf16.msra.mxu0 0
        %732 = vmatprep.mubr.bf16.mxu0 0
        %733 = vmatmul.mubr.bf16.gmra.mrb[0].mxu0 %v698
        %v734 = vpop.f32.mrb[0].mxu0
        %v735 = vadd.f32 %v695, %v734
        %v736 = vpop.f32.mrb[0].mxu0
        %v737 = vpop.f32.mrb[0].mxu0
        %v738 = vpop.f32.mrb[0].mxu0
        %739 = vdwg.mxu0
        %v740 = vpack.c.bf16 %v624, %v624
        %v741 = vld [vmem:[#allocation11] sm:$0xff]
        %v742 = vld [vmem:[#allocation11 + $0x8] sm:$0xff]
        %v743 = vld [vmem:[#allocation11 + $0x10] sm:$0xff]
        %v744 = vld [vmem:[#allocation11 + $0x18] sm:$0xff]
        %v745 = vpack.c.bf16 %v742, %v741
        %v746 = vpack.c.bf16 %v744, %v743
        %v747 = vld [vmem:[#allocation13] sm:$0x1]
        %v749 = vlaneseq
        %v750 = vshrl.u32 %v749, 7
        %v751 = vsub.s32 0, %v750
        %v752 = vrot.slane %v747, %v751
        %v755 = vsel %vm639, %v740, 0
        %757 = vmatprep.subr.bf16.mxu0 0
        %758 = vmatpush1.bf16.msra.mxu0 %v745
        %759 = vmatprep.subr.bf16.mxu0 0
        %760 = vmatpush1.bf16.msra.mxu0 %v746
        %761 = vmatprep.subr.bf16.mxu0 0
        %762 = vmatpush1.bf16.msra.mxu0 0
        %763 = vmatprep.subr.bf16.mxu0 0
        %764 = vmatpush1.bf16.msra.mxu0 0
        %765 = vmatprep.subr.bf16.mxu0 0
        %766 = vmatpush1.bf16.msra.mxu0 0
        %767 = vmatprep.subr.bf16.mxu0 0
        %768 = vmatpush1.bf16.msra.mxu0 0
        %769 = vmatprep.subr.bf16.mxu0 0
        %770 = vmatpush1.bf16.msra.mxu0 0
        %771 = vmatprep.subr.bf16.mxu0 0
        %772 = vmatpush1.bf16.msra.mxu0 0
        %773 = vmatprep.subr.bf16.mxu0 0
        %774 = vmatpush1.bf16.msra.mxu0 0
        %775 = vmatprep.subr.bf16.mxu0 0
        %776 = vmatpush1.bf16.msra.mxu0 0
        %777 = vmatprep.subr.bf16.mxu0 0
        %778 = vmatpush1.bf16.msra.mxu0 0
        %779 = vmatprep.subr.bf16.mxu0 0
        %780 = vmatpush1.bf16.msra.mxu0 0
        %781 = vmatprep.subr.bf16.mxu0 0
        %782 = vmatpush1.bf16.msra.mxu0 0
        %783 = vmatprep.subr.bf16.mxu0 0
        %784 = vmatpush1.bf16.msra.mxu0 0
        %785 = vmatprep.subr.bf16.mxu0 0
        %786 = vmatpush1.bf16.msra.mxu0 0
        %787 = vmatprep.subr.bf16.mxu0 0
        %788 = vmatpush1.bf16.msra.mxu0 0
        %789 = vmatprep.mubr.bf16.mxu0 0
        %790 = vmatmul.mubr.bf16.gmra.mrb[0].mxu0 %v755
        %v791 = vpop.f32.mrb[0].mxu0
        %v792 = vadd.f32 %v752, %v791
        %v793 = vpop.f32.mrb[0].mxu0
        %v794 = vpop.f32.mrb[0].mxu0
        %v795 = vpop.f32.mrb[0].mxu0
        %796 = vdwg.mxu0
        %v797 = vld [vmem:[%s10] sm:$0x1]
        %v799 = vlaneseq
        %v800 = vshrl.u32 %v799, 7
        %v801 = vsub.s32 0, %v800
        %v802 = vrot.slane %v797, %v801
        %v804 = vadd.f32 %v622, %v802
        %v805 = vld [vmem:[%s9] sm:$0xff]
        %v806 = vld [vmem:[%s9 + $0x8] sm:$0xff]
        %v807 = vld [vmem:[%s9 + $0x10] sm:$0xff]
        %v808 = vld [vmem:[%s9 + $0x18] sm:$0xff]
        %v809 = vpack.c.bf16 %v806, %v805
        %v810 = vpack.c.bf16 %v808, %v807
        %v811 = vpack.c.bf16 %v678, %v678
        %v812 = vpack.c.bf16 %v735, %v735
        %vm813 = vcmask 130048
        %v815 = vsel %vm813, %v811, 0
        %v818 = vsel %vm813, %v812, 0
        %820 = vmatprep.subr.bf16.mxu0 0
        %821 = vmatpush1.bf16.xpose.msra.mxu0 %v818
        %822 = vmatprep.subr.bf16.mxu0 0
        %823 = vmatpush1.bf16.xpose.msra.mxu0 0
        %824 = vmatprep.subr.bf16.mxu0 0
        %825 = vmatpush1.bf16.xpose.msra.mxu0 0
        %826 = vmatprep.subr.bf16.mxu0 0
        %827 = vmatpush1.bf16.xpose.msra.mxu0 0
        %828 = vmatprep.subr.bf16.mxu0 0
        %829 = vmatpush1.bf16.xpose.msra.mxu0 0
        %830 = vmatprep.subr.bf16.mxu0 0
        %831 = vmatpush1.bf16.xpose.msra.mxu0 0
        %832 = vmatprep.subr.bf16.mxu0 0
        %833 = vmatpush1.bf16.xpose.msra.mxu0 0
        %834 = vmatprep.subr.bf16.mxu0 0
        %835 = vmatpush1.bf16.xpose.msra.mxu0 0
        %836 = vmatprep.subr.bf16.mxu0 0
        %837 = vmatpush1.bf16.xpose.msra.mxu0 0
        %838 = vmatprep.subr.bf16.mxu0 0
        %839 = vmatpush1.bf16.xpose.msra.mxu0 0
        %840 = vmatprep.subr.bf16.mxu0 0
        %841 = vmatpush1.bf16.xpose.msra.mxu0 0
        %842 = vmatprep.subr.bf16.mxu0 0
        %843 = vmatpush1.bf16.xpose.msra.mxu0 0
        %844 = vmatprep.subr.bf16.mxu0 0
        %845 = vmatpush1.bf16.xpose.msra.mxu0 0
        %846 = vmatprep.subr.bf16.mxu0 0
        %847 = vmatpush1.bf16.xpose.msra.mxu0 0
        %848 = vmatprep.subr.bf16.mxu0 0
        %849 = vmatpush1.bf16.xpose.msra.mxu0 0
        %850 = vmatprep.subr.bf16.mxu0 0
        %851 = vmatpush1.bf16.xpose.msra.mxu0 0
        %852 = vmatprep.mubr.bf16.mxu0 0
        %853 = vmatmul.mubr.bf16.gmra.mrb[0].mxu0 %v815
        %v854 = vpop.f32.mrb[0].mxu0
        %v855 = vadd.f32 0.0, %v854
        %v856 = vpop.f32.mrb[0].mxu0
        %v857 = vpop.f32.mrb[0].mxu0
        %v858 = vpop.f32.mrb[0].mxu0
        %859 = vdwg.mxu0
        %v860 = vmul.f32 %v855, 0.25
        %vm861 = vcmask 64512
        %v862 = vsel %vm861, %v860, -inf
        %863 = vmax.xlane.f32.xlu0 %v862
        %v864 = vpop.xlane.xlu0 %863
        %v865 = vsub.f32 %v860, %v864
        %v866 = vmul.f32 %v865, 1.442695
        %v867 = vpow.pop %v866
        %v868 = vsel %vm861, %v867, 0.0
        %869 = vadd.xlane.f32.xlu0 %v868
        %v870 = vpop.xlane.xlu0 %869
        %v871 = vrcp.pop %v870
        %v872 = vmul.f32 %v867, %v871
        %873 = vst.msk [vmem:[%s620] sm:$0xff] %vm861, %v872
        %v874 = vpack.c.bf16 %v872, %v872
        %v875 = vpack.c.bf16 %v792, %v792
        %v877 = vsel %vm861, %v874, 0
        %vm879 = vcmask 1043456
        %v881 = vsel %vm879, %v875, 0
        %883 = vmatprep.subr.bf16.mxu0 0
        %884 = vmatpush1.bf16.msra.mxu0 %v881
        %885 = vmatprep.subr.bf16.mxu0 0
        %886 = vmatpush1.bf16.msra.mxu0 0
        %887 = vmatprep.subr.bf16.mxu0 0
        %888 = vmatpush1.bf16.msra.mxu0 0
        %889 = vmatprep.subr.bf16.mxu0 0
        %890 = vmatpush1.bf16.msra.mxu0 0
        %891 = vmatprep.subr.bf16.mxu0 0
        %892 = vmatpush1.bf16.msra.mxu0 0
        %893 = vmatprep.subr.bf16.mxu0 0
        %894 = vmatpush1.bf16.msra.mxu0 0
        %895 = vmatprep.subr.bf16.mxu0 0
        %896 = vmatpush1.bf16.msra.mxu0 0
        %897 = vmatprep.subr.bf16.mxu0 0
        %898 = vmatpush1.bf16.msra.mxu0 0
        %899 = vmatprep.subr.bf16.mxu0 0
        %900 = vmatpush1.bf16.msra.mxu0 0
        %901 = vmatprep.subr.bf16.mxu0 0
        %902 = vmatpush1.bf16.msra.mxu0 0
        %903 = vmatprep.subr.bf16.mxu0 0
        %904 = vmatpush1.bf16.msra.mxu0 0
        %905 = vmatprep.subr.bf16.mxu0 0
        %906 = vmatpush1.bf16.msra.mxu0 0
        %907 = vmatprep.subr.bf16.mxu0 0
        %908 = vmatpush1.bf16.msra.mxu0 0
        %909 = vmatprep.subr.bf16.mxu0 0
        %910 = vmatpush1.bf16.msra.mxu0 0
        %911 = vmatprep.subr.bf16.mxu0 0
        %912 = vmatpush1.bf16.msra.mxu0 0
        %913 = vmatprep.subr.bf16.mxu0 0
        %914 = vmatpush1.bf16.msra.mxu0 0
        %915 = vmatprep.mubr.bf16.mxu0 0
        %916 = vmatmul.mubr.bf16.gmra.mrb[0].mxu0 %v877
        %v917 = vpop.f32.mrb[0].mxu0
        %v918 = vadd.f32 0.0, %v917
        %v919 = vpop.f32.mrb[0].mxu0
        %v920 = vpop.f32.mrb[0].mxu0
        %v921 = vpop.f32.mrb[0].mxu0
        %922 = vdwg.mxu0
        %v923 = vpack.c.bf16 %v918, %v918
        %v925 = vsel %vm813, %v923, 0
        %927 = vmatprep.subr.bf16.mxu0 0
        %928 = vmatpush1.bf16.msra.mxu0 %v809
        %929 = vmatprep.subr.bf16.mxu0 0
        %930 = vmatpush1.bf16.msra.mxu0 0
        %931 = vmatprep.subr.bf16.mxu0 0
        %932 = vmatpush1.bf16.msra.mxu0 0
        %933 = vmatprep.subr.bf16.mxu0 0
        %934 = vmatpush1.bf16.msra.mxu0 0
        %935 = vmatprep.subr.bf16.mxu0 0
        %936 = vmatpush1.bf16.msra.mxu0 0
        %937 = vmatprep.subr.bf16.mxu0 0
        %938 = vmatpush1.bf16.msra.mxu0 0
        %939 = vmatprep.subr.bf16.mxu0 0
        %940 = vmatpush1.bf16.msra.mxu0 0
        %941 = vmatprep.subr.bf16.mxu0 0
        %942 = vmatpush1.bf16.msra.mxu0 0
        %943 = vmatprep.subr.bf16.mxu0 0
        %944 = vmatpush1.bf16.msra.mxu0 0
        %945 = vmatprep.subr.bf16.mxu0 0
        %946 = vmatpush1.bf16.msra.mxu0 0
        %947 = vmatprep.subr.bf16.mxu0 0
        %948 = vmatpush1.bf16.msra.mxu0 0
        %949 = vmatprep.subr.bf16.mxu0 0
        %950 = vmatpush1.bf16.msra.mxu0 0
        %951 = vmatprep.subr.bf16.mxu0 0
        %952 = vmatpush1.bf16.msra.mxu0 0
        %953 = vmatprep.subr.bf16.mxu0 0
        %954 = vmatpush1.bf16.msra.mxu0 0
        %955 = vmatprep.subr.bf16.mxu0 0
        %956 = vmatpush1.bf16.msra.mxu0 0
        %957 = vmatprep.subr.bf16.mxu0 0
        %958 = vmatpush1.bf16.msra.mxu0 0
        %959 = vmatprep.mubr.bf16.mxu0 0
        %960 = vmatmul.mubr.bf16.gmra.mrb[0].mxu0 %v925
        %v961 = vpop.f32.mrb[0].mxu0
        %v962 = vadd.f32 0.0, %v961
        %v963 = vpop.f32.mrb[0].mxu0
        %v964 = vpop.f32.mrb[0].mxu0
        %v965 = vpop.f32.mrb[0].mxu0
        %966 = vdwg.mxu0
        %v967 = vadd.f32 %v804, %v962
        %969 = vrot.lane.b32.xlu0 %v811, 112
        %v970 = vpop.permute.xlu0 %969
        %972 = vrot.lane.b32.xlu0 %v812, 112
        %v973 = vpop.permute.xlu0 %972
        %v975 = vsel %vm813, %v970, 0
        %v978 = vsel %vm813, %v973, 0
        %980 = vmatprep.subr.bf16.mxu0 0
        %981 = vmatpush1.bf16.xpose.msra.mxu0 %v978
        %982 = vmatprep.subr.bf16.mxu0 0
        %983 = vmatpush1.bf16.xpose.msra.mxu0 0
        %984 = vmatprep.subr.bf16.mxu0 0
        %985 = vmatpush1.bf16.xpose.msra.mxu0 0
        %986 = vmatprep.subr.bf16.mxu0 0
        %987 = vmatpush1.bf16.xpose.msra.mxu0 0
        %988 = vmatprep.subr.bf16.mxu0 0
        %989 = vmatpush1.bf16.xpose.msra.mxu0 0
        %990 = vmatprep.subr.bf16.mxu0 0
        %991 = vmatpush1.bf16.xpose.msra.mxu0 0
        %992 = vmatprep.subr.bf16.mxu0 0
        %993 = vmatpush1.bf16.xpose.msra.mxu0 0
        %994 = vmatprep.subr.bf16.mxu0 0
        %995 = vmatpush1.bf16.xpose.msra.mxu0 0
        %996 = vmatprep.subr.bf16.mxu0 0
        %997 = vmatpush1.bf16.xpose.msra.mxu0 0
        %998 = vmatprep.subr.bf16.mxu0 0
        %999 = vmatpush1.bf16.xpose.msra.mxu0 0
        %1000 = vmatprep.subr.bf16.mxu0 0
        %1001 = vmatpush1.bf16.xpose.msra.mxu0 0
        %1002 = vmatprep.subr.bf16.mxu0 0
        %1003 = vmatpush1.bf16.xpose.msra.mxu0 0
        %1004 = vmatprep.subr.bf16.mxu0 0
        %1005 = vmatpush1.bf16.xpose.msra.mxu0 0
        %1006 = vmatprep.subr.bf16.mxu0 0
        %1007 = vmatpush1.bf16.xpose.msra.mxu0 0
        %1008 = vmatprep.subr.bf16.mxu0 0
        %1009 = vmatpush1.bf16.xpose.msra.mxu0 0
        %1010 = vmatprep.subr.bf16.mxu0 0
        %1011 = vmatpush1.bf16.xpose.msra.mxu0 0
        %1012 = vmatprep.mubr.bf16.mxu0 0
        %1013 = vmatmul.mubr.bf16.gmra.mrb[0].mxu0 %v975
        %v1014 = vpop.f32.mrb[0].mxu0
        %v1015 = vadd.f32 0.0, %v1014
        %v1016 = vpop.f32.mrb[0].mxu0
        %v1017 = vpop.f32.mrb[0].mxu0
        %v1018 = vpop.f32.mrb[0].mxu0
        %1019 = vdwg.mxu0
        %v1020 = vmul.f32 %v1015, 0.25
        %v1021 = vsel %vm861, %v1020, -inf
        %1022 = vmax.xlane.f32.xlu0 %v1021
        %v1023 = vpop.xlane.xlu0 %1022
        %v1024 = vsub.f32 %v1020, %v1023
        %v1025 = vmul.f32 %v1024, 1.442695
        %v1026 = vpow.pop %v1025
        %v1027 = vsel %vm861, %v1026, 0.0
        %1028 = vadd.xlane.f32.xlu0 %v1027
        %v1029 = vpop.xlane.xlu0 %1028
        %v1030 = vrcp.pop %v1029
        %v1031 = vmul.f32 %v1026, %v1030
        %s1032 = scalar_lea.vmem %s620, 8 [#allocation15]
        %1033 = vst.msk [vmem:[%s1032] sm:$0xff] %vm861, %v1031
        %v1034 = vpack.c.bf16 %v1031, %v1031
        %1036 = vrot.lane.b32.xlu0 %v875, 112
        %v1037 = vpop.permute.xlu0 %1036
        %v1039 = vsel %vm861, %v1034, 0
        %v1042 = vsel %vm879, %v1037, 0
        %1044 = vmatprep.subr.bf16.mxu0 0
        %1045 = vmatpush1.bf16.msra.mxu0 %v1042
        %1046 = vmatprep.subr.bf16.mxu0 0
        %1047 = vmatpush1.bf16.msra.mxu0 0
        %1048 = vmatprep.subr.bf16.mxu0 0
        %1049 = vmatpush1.bf16.msra.mxu0 0
        %1050 = vmatprep.subr.bf16.mxu0 0
        %1051 = vmatpush1.bf16.msra.mxu0 0
        %1052 = vmatprep.subr.bf16.mxu0 0
        %1053 = vmatpush1.bf16.msra.mxu0 0
        %1054 = vmatprep.subr.bf16.mxu0 0
        %1055 = vmatpush1.bf16.msra.mxu0 0
        %1056 = vmatprep.subr.bf16.mxu0 0
        %1057 = vmatpush1.bf16.msra.mxu0 0
        %1058 = vmatprep.subr.bf16.mxu0 0
        %1059 = vmatpush1.bf16.msra.mxu0 0
        %1060 = vmatprep.subr.bf16.mxu0 0
        %1061 = vmatpush1.bf16.msra.mxu0 0
        %1062 = vmatprep.subr.bf16.mxu0 0
        %1063 = vmatpush1.bf16.msra.mxu0 0
        %1064 = vmatprep.subr.bf16.mxu0 0
        %1065 = vmatpush1.bf16.msra.mxu0 0
        %1066 = vmatprep.subr.bf16.mxu0 0
        %1067 = vmatpush1.bf16.msra.mxu0 0
        %1068 = vmatprep.subr.bf16.mxu0 0
        %1069 = vmatpush1.bf16.msra.mxu0 0
        %1070 = vmatprep.subr.bf16.mxu0 0
        %1071 = vmatpush1.bf16.msra.mxu0 0
        %1072 = vmatprep.subr.bf16.mxu0 0
        %1073 = vmatpush1.bf16.msra.mxu0 0
        %1074 = vmatprep.subr.bf16.mxu0 0
        %1075 = vmatpush1.bf16.msra.mxu0 0
        %1076 = vmatprep.mubr.bf16.mxu0 0
        %1077 = vmatmul.mubr.bf16.gmra.mrb[0].mxu0 %v1039
        %v1078 = vpop.f32.mrb[0].mxu0
        %v1079 = vadd.f32 0.0, %v1078
        %v1080 = vpop.f32.mrb[0].mxu0
        %v1081 = vpop.f32.mrb[0].mxu0
        %v1082 = vpop.f32.mrb[0].mxu0
        %1083 = vdwg.mxu0
        %v1084 = vpack.c.bf16 %v1079, %v1079
        %v1086 = vsel %vm813, %v1084, 0
        %1088 = vmatprep.subr.bf16.mxu0 0
        %1089 = vmatpush1.bf16.msra.mxu0 %v810
        %1090 = vmatprep.subr.bf16.mxu0 0
        %1091 = vmatpush1.bf16.msra.mxu0 0
        %1092 = vmatprep.subr.bf16.mxu0 0
        %1093 = vmatpush1.bf16.msra.mxu0 0
        %1094 = vmatprep.subr.bf16.mxu0 0
        %1095 = vmatpush1.bf16.msra.mxu0 0
        %1096 = vmatprep.subr.bf16.mxu0 0
        %1097 = vmatpush1.bf16.msra.mxu0 0
        %1098 = vmatprep.subr.bf16.mxu0 0
        %1099 = vmatpush1.bf16.msra.mxu0 0
        %1100 = vmatprep.subr.bf16.mxu0 0
        %1101 = vmatpush1.bf16.msra.mxu0 0
        %1102 = vmatprep.subr.bf16.mxu0 0
        %1103 = vmatpush1.bf16.msra.mxu0 0
        %1104 = vmatprep.subr.bf16.mxu0 0
        %1105 = vmatpush1.bf16.msra.mxu0 0
        %1106 = vmatprep.subr.bf16.mxu0 0
        %1107 = vmatpush1.bf16.msra.mxu0 0
        %1108 = vmatprep.subr.bf16.mxu0 0
        %1109 = vmatpush1.bf16.msra.mxu0 0
        %1110 = vmatprep.subr.bf16.mxu0 0
        %1111 = vmatpush1.bf16.msra.mxu0 0
        %1112 = vmatprep.subr.bf16.mxu0 0
        %1113 = vmatpush1.bf16.msra.mxu0 0
        %1114 = vmatprep.subr.bf16.mxu0 0
        %1115 = vmatpush1.bf16.msra.mxu0 0
        %1116 = vmatprep.subr.bf16.mxu0 0
        %1117 = vmatpush1.bf16.msra.mxu0 0
        %1118 = vmatprep.subr.bf16.mxu0 0
        %1119 = vmatpush1.bf16.msra.mxu0 0
        %1120 = vmatprep.mubr.bf16.mxu0 0
        %1121 = vmatmul.mubr.bf16.gmra.mrb[0].mxu0 %v1086
        %v1122 = vpop.f32.mrb[0].mxu0
        %v1123 = vadd.f32 0.0, %v1122
        %v1124 = vpop.f32.mrb[0].mxu0
        %v1125 = vpop.f32.mrb[0].mxu0
        %v1126 = vpop.f32.mrb[0].mxu0
        %1127 = vdwg.mxu0
        %v1128 = vadd.f32 %v967, %v1123
        %v1129 = vsel %vm639, %v1128, 0.0
        %1130 = vadd.xlane.f32.xlu0 %v1129
        %v1131 = vpop.xlane.xlu0 %1130
        %v1132 = vrcp.pop 32.0
        %v1133 = vmul.f32 %v1131, %v1132
        %v1134 = vsub.f32 %v1128, %v1133
        %v1135 = vmul.f32 %v1134, %v1134
        %v1136 = vsel %vm639, %v1135, 0.0
        %1137 = vadd.xlane.f32.xlu0 %v1136
        %v1138 = vpop.xlane.xlu0 %1137
        %v1139 = vmul.f32 %v1138, %v1132
        %v1140 = vadd.f32 %v1139, 1e-12
        %v1141 = vrsqrt.pop %v1140
        %v1142 = vmul.f32 %v1134, %v1141
        %v1143 = vld [vmem:[%s11] sm:$0x1]
        %v1145 = vlaneseq
        %v1146 = vshrl.u32 %v1145, 7
        %v1147 = vsub.s32 0, %v1146
        %v1148 = vrot.slane %v1143, %v1147
        %v1150 = vmul.f32 %v1142, %v1148
        %v1151 = vld [vmem:[%s12] sm:$0x1]
        %v1153 = vlaneseq
        %v1154 = vshrl.u32 %v1153, 7
        %v1155 = vsub.s32 0, %v1154
        %v1156 = vrot.slane %v1151, %v1155
        %v1158 = vadd.f32 %v1150, %v1156
        %1159 = vst.msk [vmem:[%s613] sm:$0xff] %vm639, %v1158
        %s1160 = sand.u32 %s336, 1
        %s1161 = scalar_lea.sflag [#allocation4], %s1160
        %s1162 = sand.u32 %s336, 1
        %s1163 = smul.addr %s1162, 8
        %s1164 = scalar_lea.vmem [#allocation14], %s1163
        %s1165 = sand.u32 %s362, 1
        %s1166 = scalar_lea.sflag [#allocation16], %s1165
        %s1167 = sand.u32 %s362, 1
        %s1168 = smul.addr %s1167, 16
        %s1169 = scalar_lea.vmem [#allocation15], %s1168
        // Predicated region
        $region101: #{tpu_custom_call.1} parent=71 // pred_check
          %p1170 = pneg %p346
        $region102: #{tpu_custom_call.1} parent=71 // pred_check_branch
          %1172 = sbr.rel (%p1170) target = $region104
        $region103: #{tpu_custom_call.1} parent=71 // pred_region
          %s1174 = ssub.s32 128, 128
          %1175 = vsyncadd %s1161, %s1174
          %s1176 = smul.addr %s40, 128
          %s1177 = scalar_lea.hbm %s13, %s1176
          %s1179 = sshll.u32 %s1164, 4
          %s1180 = int_to_ptr.vmem [resolvable:$true] %s1179
          %1182 = dma.vmem_to_hbm [thread:$0]  %s1180, 128, %s1177, %s1161
        $region104: #{tpu_custom_call.1} parent=71 // pred_fallthru
          _
        // Predicated region
        $region105: #{tpu_custom_call.1} parent=71 // pred_check
          %p1183 = pneg %p372
        $region106: #{tpu_custom_call.1} parent=71 // pred_check_branch
          %1185 = sbr.rel (%p1183) target = $region108
        $region107: #{tpu_custom_call.1} parent=71 // pred_region
          %s1187 = ssub.s32 256, 256
          %1188 = vsyncadd %s1166, %s1187
          %s1189 = smul.addr %s40, 2
          %s1190 = smul.addr %s1189, 128
          %s1191 = scalar_lea.hbm %s14, %s1190
          %s1192 = sshll.u32 %s1169, 4
          %s1193 = int_to_ptr.vmem [resolvable:$true] %s1192
          %1198 = dma.vmem_to_hbm [thread:$0]  %s1193, 256, %s1191, %s1166, 128, 128, 8
        $region108: #{tpu_custom_call.1} parent=71 // pred_fallthru
          _
      $region72: #{tpu_custom_call.1} parent=5 // pred_fallthru
        _
      %p1199 = scmp.le.s32.totalorder 2, %s35
      // Predicated region
      $region109: #{tpu_custom_call.1} parent=5 // pred_check
        %p1200 = pneg %p1199
      $region110: #{tpu_custom_call.1} parent=5 // pred_check_branch
        %1202 = sbr.rel (%p1200) target = $region112
      $region111: #{tpu_custom_call.1} parent=5 // pred_region
        %s1203 = ssub.s32 %s35, 2
        // Predicated region
        $region113: #{tpu_custom_call.1} parent=111 // pred_check
          %p1204 = pneg %p352
        $region114: #{tpu_custom_call.1} parent=111 // pred_check_branch
          %1206 = sbr.rel (%p1204) target = $region116
        $region115: #{tpu_custom_call.1} parent=111 // pred_region
          %s1207 = sand.u32 %s337, 1
          %s1208 = scalar_lea.sflag [#allocation4], %s1207
          %s1209 = sand.u32 %s337, 1
          %s1210 = smul.addr %s1209, 8
          %s1211 = scalar_lea.vmem [#allocation14], %s1210
          %1212 = dma.done %s1208, 128
        $region116: #{tpu_custom_call.1} parent=111 // pred_fallthru
          _
        // Predicated region
        $region117: #{tpu_custom_call.1} parent=111 // pred_check
          %p1213 = pneg %p378
        $region118: #{tpu_custom_call.1} parent=111 // pred_check_branch
          %1215 = sbr.rel (%p1213) target = $region120
        $region119: #{tpu_custom_call.1} parent=111 // pred_region
          %s1216 = sand.u32 %s363, 1
          %s1217 = scalar_lea.sflag [#allocation16], %s1216
          %s1218 = sand.u32 %s363, 1
          %s1219 = smul.addr %s1218, 16
          %s1220 = scalar_lea.vmem [#allocation15], %s1219
          %1221 = dma.done %s1217, 256
        $region120: #{tpu_custom_call.1} parent=111 // pred_fallthru
          _
      $region112: #{tpu_custom_call.1} parent=5 // pred_fallthru
        _
    $region6: #{tpu_custom_call.1} parent=1 // loop_footer
      %s39 = sadd.s32 1, %s35
    $region7: #{tpu_custom_call.1} parent=1 // loop_footer_branch
      %34 = sbr.rel target = $region3
    $region8: #{tpu_custom_call.1} parent=1 // loop_exit
      _
    %1222 = vsyncpa [#allocation3], 1
    %s1223 = scalar_lea.sflag [#allocation3], 1
    %1224 = vsyncpa %s1223, 1
    %1225 = vsyncpa [#allocation6], 1
    %s1226 = scalar_lea.sflag [#allocation6], 1
    %1227 = vsyncpa %s1226, 1
    %1228 = vsyncpa [#allocation9], 1
    %1229 = vsyncpa [#allocation12], 1
    %1230 = vsyncpa [#allocation4], 1
    %s1231 = scalar_lea.sflag [#allocation4], 1
    %1232 = vsyncpa %s1231, 1
    %1233 = vsyncpa [#allocation16], 1
    %s1234 = scalar_lea.sflag [#allocation16], 1
    %1235 = vsyncpa %s1234, 1

</llo_original>
